<compile_context>
chip_gen: v7x
topology: tpu7x:2x2x1
jax: 0.10.0
libtpu: 0.0.40
codegen_flags: <defaults>
</compile_context>

<pallas_src>
import math

import jax
import jax.numpy as jnp
import numpy as np
from jax import lax
from jax.experimental import pallas as pl
from jax.experimental.pallas import tpu as pltpu


def _make_layer_kernel(*, eps, perturbed, e_resident, tk):
    """One propagation layer: out = perturb(adj @ e).

    Grid = (row_tiles "parallel", k_tiles "arbitrary").  The f32 output block
    is VMEM-resident across the reduction axis and doubles as the accumulator.
    adj / e are bf16 MXU inputs; accumulation is f32.
    """

    def kernel(adj_ref, e_ref, *rest):
        if perturbed:
            noise_ref, out_ref = rest
        else:
            noise_ref = None
            (out_ref,) = rest

        k = pl.program_id(1)

        @pl.when(k == 0)
        def _():
            out_ref[...] = jnp.zeros_like(out_ref)

        if e_resident:
            # Whole embedding matrix lives in VMEM; take the K slice in-place.
            start = pl.multiple_of(k * tk, tk)
            e = e_ref[pl.ds(start, tk), :]
        else:
            e = e_ref[...]

        out_ref[...] += jnp.dot(adj_ref[...], e,
                                preferred_element_type=jnp.float32)

        if perturbed:
            @pl.when(k == pl.num_programs(1) - 1)
            def _():
                # E += sign(E) * F.normalize(noise, dim=-1) * eps
                cur = out_ref[...]
                noise = noise_ref[...]
                nrm2 = jnp.sum(noise * noise, axis=-1, keepdims=True)
                # rsqrt(max(n2, 1e-24)) == 1 / max(||n||, 1e-12)   (EUP slot)
                inv = lax.rsqrt(jnp.maximum(nrm2, 1e-24))
                out_ref[...] = cur + jnp.sign(cur) * (noise * (inv * eps))

    return kernel


def simgcl_forward(adj, user_emb, item_emb, *, n_layers, eps, key,
                   dropout_p=0.1, perturbed=False, training=True,
                   tm=512, tk=512):
    """SimGCL_Encoder.forward(perturbed) -> (user_embeddings, item_embeddings)."""
    user_num = user_emb.shape[0]
    ego = jnp.concatenate([user_emb, item_emb], axis=0).astype(jnp.float32)
    N, D = ego.shape

    # nn.Dropout(0.1) applied once to the ego embeddings (wrapper-side, one
    # XLA pass) exactly as in the PyTorch module -- never bound to the kernel.
    k_drop, k_noise = jax.random.split(key)
    if bool(training) and float(dropout_p) > 0.0:
        u = jax.random.uniform(k_drop, (N, D), jnp.float32)
        ego = jnp.where(u >= dropout_p, ego * (1.0 / (1.0 - dropout_p)), 0.0)

    # Lane-pad the embedding dim to a multiple of 128; pad N so both tile
    # sizes divide it.  Padded rows/lanes are exactly zero and stay zero.
    d_pad = max(128, pl.cdiv(D, 128) * 128)
    align = math.lcm(tm, tk)
    n_pad = pl.cdiv(N, align) * align

    ego_p = jnp.zeros((n_pad, d_pad), jnp.float32).at[:N, :D].set(ego)
    # Padded bf16 adjacency built directly (no f32 intermediate).
    adj_bf16 = jnp.zeros((n_pad, n_pad), jnp.bfloat16).at[:N, :N].set(
        adj.astype(jnp.bfloat16))

    noise = None
    if perturbed:
        noise = jnp.zeros((n_layers, n_pad, d_pad), jnp.float32)
        noise = noise.at[:, :N, :D].set(
            jax.random.uniform(k_noise, (n_layers, N, D), jnp.float32))

    # Keep the embedding fully VMEM-resident when small enough (bf16 bytes).
    e_bytes = n_pad * d_pad * 2
    e_resident = e_bytes <= (8 << 20)

    grid = (n_pad // tm, n_pad // tk)
    in_specs = [pl.BlockSpec((tm, tk), lambda i, k: (i, k))]        # adj tile
    if e_resident:
        in_specs.append(pl.BlockSpec((n_pad, d_pad), lambda i, k: (0, 0)))
    else:
        in_specs.append(pl.BlockSpec((tk, d_pad), lambda i, k: (k, 0)))
    if perturbed:
        in_specs.append(pl.BlockSpec((tm, d_pad), lambda i, k: (i, 0)))
    out_specs = pl.BlockSpec((tm, d_pad), lambda i, k: (i, 0))

    # VMEM budget computed from the actual footprint (2 buffers per operand),
    # capped below the 64 MiB physical VMEM of a v7x TensorCore.
    adj_tile_b = tm * tk * 2
    e_b = e_bytes if e_resident else tk * d_pad * 2
    noise_b = tm * d_pad * 4 if perturbed else 0
    out_b = tm * d_pad * 4
    needed = 2 * (adj_tile_b + e_b + noise_b + out_b)
    vmem_limit = int(max(16 << 20, min(2 * needed + (2 << 20), 48 << 20)))

    grid_spec = pltpu.PrefetchScalarGridSpec(
        num_scalar_prefetch=0,
        grid=grid,
        in_specs=in_specs,
        out_specs=out_specs,
    )
    compiler_params = pltpu.CompilerParams(
        dimension_semantics=("parallel", "arbitrary"),
        vmem_limit_bytes=vmem_limit,
    )
    kernel = _make_layer_kernel(eps=float(eps), perturbed=bool(perturbed),
                                e_resident=e_resident, tk=tk)
    layer_call = pl.pallas_call(
        kernel,
        out_shape=jax.ShapeDtypeStruct((n_pad, d_pad), jnp.float32),
        grid_spec=grid_spec,
        compiler_params=compiler_params,
    )

    cur = ego_p                       # f32; streamed into the kernel as bf16
    acc = jnp.zeros_like(ego_p)
    for layer in range(n_layers):
        args = [adj_bf16, cur.astype(jnp.bfloat16)]
        if perturbed:
            args.append(noise[layer])
        cur = layer_call(*args)
        acc = acc + cur

    out = acc * (1.0 / n_layers)      # torch.stack(..., 1).mean(1)
    return out[:user_num, :D], out[user_num:N, :D]


def _reference_forward(adj, user_emb, item_emb, *, n_layers):
    """Pure-JAX reference for the deterministic path (no dropout / noise)."""
    ego = jnp.concatenate([user_emb, item_emb], axis=0).astype(jnp.float32)
    cur = ego
    acc = jnp.zeros_like(ego)
    for _ in range(n_layers):
        cur = adj @ cur
        acc = acc + cur
    out = acc / n_layers
    return out[:user_emb.shape[0]], out[user_emb.shape[0]:]


if __name__ == "__main__":
    key = jax.random.PRNGKey(0)
    user_num, item_num, emb_size = 200, 300, 32
    n_layers, eps = 2, 0.1

    k_u, k_i, k_g, k_fwd = jax.random.split(key, 4)

    # xavier_uniform_ init for the two embedding tables.
    lim_u = (6.0 / (user_num + emb_size)) ** 0.5
    user_emb = jax.random.uniform(k_u, (user_num, emb_size), jnp.float32,
                                  minval=-lim_u, maxval=lim_u)
    lim_i = (6.0 / (item_num + emb_size)) ** 0.5
    item_emb = jax.random.uniform(k_i, (item_num, emb_size), jnp.float32,
                                  minval=-lim_i, maxval=lim_i)

    # Deterministic synthetic bipartite interaction graph -> symmetrically
    # normalized adjacency (the role of data.norm_adj).
    N = user_num + item_num
    R = (jax.random.uniform(k_g, (user_num, item_num)) < 0.05).astype(jnp.float32)
    A = jnp.zeros((N, N), jnp.float32)
    A = A.at[:user_num, user_num:].set(R)
    A = A.at[user_num:, :user_num].set(R.T)
    deg = jnp.maximum(A.sum(axis=1), 1.0)
    d_inv_sqrt = 1.0 / jnp.sqrt(deg)
    adj = A * d_inv_sqrt[:, None] * d_inv_sqrt[None, :]

    # 1) Deterministic path (dropout off, perturbed=False) vs pure-JAX reference.
    u_out, i_out = simgcl_forward(adj, user_emb, item_emb, n_layers=n_layers,
                                  eps=eps, key=k_fwd, perturbed=False,
                                  training=False)
    jax.block_until_ready((u_out, i_out))
    u_ref, i_ref = _reference_forward(adj, user_emb, item_emb, n_layers=n_layers)
    np.testing.assert_allclose(np.asarray(u_out), np.asarray(u_ref),
                               rtol=5e-2, atol=5e-3)
    np.testing.assert_allclose(np.asarray(i_out), np.asarray(i_ref),
                               rtol=5e-2, atol=5e-3)
    assert u_out.shape == (user_num, emb_size)
    assert i_out.shape == (item_num, emb_size)

    # 2) Training / contrastive view: dropout + per-layer perturbation.
    u_p, i_p = simgcl_forward(adj, user_emb, item_emb, n_layers=n_layers,
                              eps=eps, key=k_fwd, perturbed=True, training=True)
    jax.block_until_ready((u_p, i_p))
    assert u_p.shape == (user_num, emb_size)
    assert i_p.shape == (item_num, emb_size)
    assert bool(jnp.all(jnp.isfinite(u_p))) and bool(jnp.all(jnp.isfinite(i_p)))

    print("KERNEL_OK")
</pallas_src>

<mosaic_0001>
module attributes {stable_mosaic.version = 11 : i64} {
  func.func @kernel(%arg0: i32, %arg1: i32, %arg2: memref<512x512xbf16, #tpu.memory_space<vmem>>, %arg3: memref<512x128xbf16, #tpu.memory_space<vmem>>, %arg4: memref<512x128xf32, #tpu.memory_space<vmem>>) attributes {dimension_semantics = [#tpu.dimension_semantics<parallel>, #tpu.dimension_semantics<arbitrary>], iteration_bounds = array<i64: 1, 1>, scalar_prefetch = 0 : i64, scratch_operands = 0 : i64, tpu.core_type = #tpu.core_type<tc>, window_params = [{transform_indices = @transform_0, window_bounds = array<i64: 512, 512>}, {pipeline_mode = #tpu.pipeline_mode<synchronous>, transform_indices = @transform_1, window_bounds = array<i64: 512, 128>}, {transform_indices = @transform_2, window_bounds = array<i64: 512, 128>}]} {
    %c0_i32 = arith.constant 0 : i32
    %0 = arith.cmpi eq, %arg1, %c0_i32 : i32
    %1 = arith.extui %0 : i1 to i32
    %c0_i32_0 = arith.constant 0 : i32
    %2 = arith.cmpi ne, %1, %c0_i32_0 : i32
    scf.if %2 {
      %cst_7 = arith.constant 0.000000e+00 : f32
      %12 = vector.broadcast %cst_7 : f32 to vector<512x128xf32>
      %c0_8 = arith.constant 0 : index
      %c0_9 = arith.constant 0 : index
      %13 = vector.load %arg4[%c0_8, %c0_9] : memref<512x128xf32, #tpu.memory_space<vmem>>, vector<512x128xf32>
      tpu.vector_store %arg4[%c0_8, %c0_9], %12 {strides = array<i32>} : memref<512x128xf32, #tpu.memory_space<vmem>>, vector<512x128xf32>,
    } else {
    }
    %c512_i32 = arith.constant 512 : i32
    %3 = arith.muli %arg1, %c512_i32 : i32
    %4 = tpu.assume_multiple %3, 512 : i32
    %5 = arith.index_cast %4 : i32 to index
    %c0 = arith.constant 0 : index
    %6 = vector.load %arg3[%5, %c0] : memref<512x128xbf16, #tpu.memory_space<vmem>>, vector<512x128xbf16>
    %c0_1 = arith.constant 0 : index
    %c0_2 = arith.constant 0 : index
    %7 = vector.load %arg4[%c0_1, %c0_2] : memref<512x128xf32, #tpu.memory_space<vmem>>, vector<512x128xf32>
    %c0_3 = arith.constant 0 : index
    %c0_4 = arith.constant 0 : index
    %8 = vector.load %arg2[%c0_3, %c0_4] : memref<512x512xbf16, #tpu.memory_space<vmem>>, vector<512x512xbf16>
    %cst = arith.constant dense<0.000000e+00> : vector<512x128xf32>
    %9 = tpu.matmul %8, %6, %cst {dimension_numbers = #tpu.dot_dimension_numbers<[1], [0], [0], [1], [0, 0, 1, 1], [], []>} : vector<512x512xbf16>, vector<512x128xbf16>, vector<512x128xf32> -> vector<512x128xf32>
    %10 = arith.addf %7, %9 : vector<512x128xf32>
    %c0_5 = arith.constant 0 : index
    %c0_6 = arith.constant 0 : index
    %11 = vector.load %arg4[%c0_5, %c0_6] : memref<512x128xf32, #tpu.memory_space<vmem>>, vector<512x128xf32>
    tpu.vector_store %arg4[%c0_5, %c0_6], %10 {strides = array<i32>} : memref<512x128xf32, #tpu.memory_space<vmem>>, vector<512x128xf32>,
    return
  }
  func.func @transform_0(%arg0: i32, %arg1: i32) -> (i32, i32) {
    %c0_i32 = arith.constant 0 : i32
    return %arg0, %arg1 : i32, i32
  }
  func.func @transform_1(%arg0: i32, %arg1: i32) -> (i32, i32) {
    %c0_i32 = arith.constant 0 : i32
    %c0_i32_0 = arith.constant 0 : i32
    %c0_i32_1 = arith.constant 0 : i32
    return %c0_i32, %c0_i32_0 : i32, i32
  }
  func.func @transform_2(%arg0: i32, %arg1: i32) -> (i32, i32) {
    %c0_i32 = arith.constant 0 : i32
    %c0_i32_0 = arith.constant 0 : i32
    return %arg0, %c0_i32 : i32, i32
  }
}

</mosaic_0001>

<llo_original>
// kernel: tpu_custom_call.1
$region0: #{tpu_custom_call.1}
  #allocation0 [shape = 'u32[]', space=smem, size = 0x4, offset = 0x4, fixed_abs, tag = 'smem constant byte address 0x4 - core index']
  #allocation1 [shape = 'u32[144,128]{1,0:T(1,128)}', space=vmem, size = 0x12000, scoped, tag = 'internal scratch']
  %s0 = inlined_call_operand.hbm [shape: bf16[512,512], index: 0, kind: input, shape index: {}]
  %s1 = inlined_call_operand.hbm [shape: bf16[512,128], index: 1, kind: input, shape index: {}]
  %s2 = inlined_call_operand.hbm [shape: f32[512,128], index: 2, kind: output, shape index: {}]
  %s3 = sld [smem:[#allocation0]]
  $region30: #{tpu_custom_call.1} parent=0
    _
  %s5 = ssub.s32 1, %s3
  %s6 = scalar_select 0, %s5, %s3
  $region1: #{tpu_custom_call.1} parent=0
    #allocation2 [shape = 'u8[524288]{0}', space=vmem, size = 0x80000, scoped, tag = 'input window, operand 0, single buffered']
    #allocation3 [shape = 's32[1]{0}', space=sflag, size = 0x4, scoped, tag = 'scoped memory for tpu_custom_call.1']
    #allocation4 [shape = 's32[1]{0}', space=sflag, size = 0x4, scoped, tag = 'scoped memory for tpu_custom_call.1']
    #allocation5 [shape = 'u8[131072]{0}', space=vmem, size = 0x20000, scoped, tag = 'input window, operand 1, single buffered']
    #allocation6 [shape = 's32[1]{0}', space=sflag, size = 0x4, scoped, tag = 'scoped memory for tpu_custom_call.1']
    #allocation7 [shape = 'u8[262144]{0}', space=vmem, size = 0x40000, scoped, tag = 'output window, operand 0, single buffered']
    %7 = vsyncpa [#allocation3], 0
    %8 = vsyncpa [#allocation6], 0
    %9 = vsyncpa [#allocation4], 0
    // Predicated region
    $region2: #{tpu_custom_call.1} parent=1 // pred_check
      _
    $region3: #{tpu_custom_call.1} parent=1 // pred_check_branch
      %11 = sbr.rel (0) target = $region5
    $region4: #{tpu_custom_call.1} parent=1 // pred_region
      %s13 = ssub.s32 16384, 16384
      %14 = vsyncadd [#allocation3], %s13
      %s15 = sshll.u32 [#allocation2], 4
      %s16 = int_to_ptr.vmem [resolvable:$true] %s15
      %21 = dma.hbm_to_vmem [thread:$0]  %s0, 16384, %s16, [#allocation3], 256, 256, 16
    $region5: #{tpu_custom_call.1} parent=1 // pred_fallthru
      _
    // Predicated region
    $region6: #{tpu_custom_call.1} parent=1 // pred_check
      _
    $region7: #{tpu_custom_call.1} parent=1 // pred_check_branch
      %23 = sbr.rel (0) target = $region9
    $region8: #{tpu_custom_call.1} parent=1 // pred_region
      %s25 = ssub.s32 4096, 4096
      %26 = vsyncadd [#allocation6], %s25
      %s27 = sshll.u32 [#allocation5], 4
      %s28 = int_to_ptr.vmem [resolvable:$true] %s27
      %33 = dma.hbm_to_vmem [thread:$0]  %s1, 4096, %s28, [#allocation6], 64, 64, 4
    $region9: #{tpu_custom_call.1} parent=1 // pred_fallthru
      _
    // Predicated region
    $region10: #{tpu_custom_call.1} parent=1 // pred_check
      _
    $region11: #{tpu_custom_call.1} parent=1 // pred_check_branch
      %35 = sbr.rel (0) target = $region13
    $region12: #{tpu_custom_call.1} parent=1 // pred_region
      %36 = dma.done [#allocation3], 16384
    $region13: #{tpu_custom_call.1} parent=1 // pred_fallthru
      _
    // Predicated region
    $region14: #{tpu_custom_call.1} parent=1 // pred_check
      _
    $region15: #{tpu_custom_call.1} parent=1 // pred_check_branch
      %38 = sbr.rel (0) target = $region17
    $region16: #{tpu_custom_call.1} parent=1 // pred_region
      %39 = dma.done [#allocation6], 4096
    $region17: #{tpu_custom_call.1} parent=1 // pred_fallthru
      _
    %p41 = scmp.eq.s32.totalorder 0, 0
    // Predicated region
    $region18: #{tpu_custom_call.1} parent=1 // pred_check
      %p42 = pneg %p41
    $region19: #{tpu_custom_call.1} parent=1 // pred_check_branch
      %44 = sbr.rel (%p42) target = $region21
    $region20: #{tpu_custom_call.1} parent=1 // pred_region
      %45 = vst [vmem:[#allocation7] sm:$0xff] 0.0
      %46 = vst [vmem:[#allocation7 + $0x8] sm:$0xff] 0.0
      %47 = vst [vmem:[#allocation7 + $0x10] sm:$0xff] 0.0
      %48 = vst [vmem:[#allocation7 + $0x18] sm:$0xff] 0.0
      %49 = vst [vmem:[#allocation7 + $0x20] sm:$0xff] 0.0
      %50 = vst [vmem:[#allocation7 + $0x28] sm:$0xff] 0.0
      %51 = vst [vmem:[#allocation7 + $0x30] sm:$0xff] 0.0
      %52 = vst [vmem:[#allocation7 + $0x38] sm:$0xff] 0.0
      %53 = vst [vmem:[#allocation7 + $0x40] sm:$0xff] 0.0
      %54 = vst [vmem:[#allocation7 + $0x48] sm:$0xff] 0.0
      %55 = vst [vmem:[#allocation7 + $0x50] sm:$0xff] 0.0
      %56 = vst [vmem:[#allocation7 + $0x58] sm:$0xff] 0.0
      %57 = vst [vmem:[#allocation7 + $0x60] sm:$0xff] 0.0
      %58 = vst [vmem:[#allocation7 + $0x68] sm:$0xff] 0.0
      %59 = vst [vmem:[#allocation7 + $0x70] sm:$0xff] 0.0
      %60 = vst [vmem:[#allocation7 + $0x78] sm:$0xff] 0.0
      %61 = vst [vmem:[#allocation7 + $0x80] sm:$0xff] 0.0
      %62 = vst [vmem:[#allocation7 + $0x88] sm:$0xff] 0.0
      %63 = vst [vmem:[#allocation7 + $0x90] sm:$0xff] 0.0
      %64 = vst [vmem:[#allocation7 + $0x98] sm:$0xff] 0.0
      %65 = vst [vmem:[#allocation7 + $0xa0] sm:$0xff] 0.0
      %66 = vst [vmem:[#allocation7 + $0xa8] sm:$0xff] 0.0
      %67 = vst [vmem:[#allocation7 + $0xb0] sm:$0xff] 0.0
      %68 = vst [vmem:[#allocation7 + $0xb8] sm:$0xff] 0.0
      %69 = vst [vmem:[#allocation7 + $0xc0] sm:$0xff] 0.0
      %70 = vst [vmem:[#allocation7 + $0xc8] sm:$0xff] 0.0
      %71 = vst [vmem:[#allocation7 + $0xd0] sm:$0xff] 0.0
      %72 = vst [vmem:[#allocation7 + $0xd8] sm:$0xff] 0.0
      %73 = vst [vmem:[#allocation7 + $0xe0] sm:$0xff] 0.0
      %74 = vst [vmem:[#allocation7 + $0xe8] sm:$0xff] 0.0
      %75 = vst [vmem:[#allocation7 + $0xf0] sm:$0xff] 0.0
      %76 = vst [vmem:[#allocation7 + $0xf8] sm:$0xff] 0.0
      %77 = vst [vmem:[#allocation7 + $0x100] sm:$0xff] 0.0
      %78 = vst [vmem:[#allocation7 + $0x108] sm:$0xff] 0.0
      %79 = vst [vmem:[#allocation7 + $0x110] sm:$0xff] 0.0
      %80 = vst [vmem:[#allocation7 + $0x118] sm:$0xff] 0.0
      %81 = vst [vmem:[#allocation7 + $0x120] sm:$0xff] 0.0
      %82 = vst [vmem:[#allocation7 + $0x128] sm:$0xff] 0.0
      %83 = vst [vmem:[#allocation7 + $0x130] sm:$0xff] 0.0
      %84 = vst [vmem:[#allocation7 + $0x138] sm:$0xff] 0.0
      %85 = vst [vmem:[#allocation7 + $0x140] sm:$0xff] 0.0
      %86 = vst [vmem:[#allocation7 + $0x148] sm:$0xff] 0.0
      %87 = vst [vmem:[#allocation7 + $0x150] sm:$0xff] 0.0
      %88 = vst [vmem:[#allocation7 + $0x158] sm:$0xff] 0.0
      %89 = vst [vmem:[#allocation7 + $0x160] sm:$0xff] 0.0
      %90 = vst [vmem:[#allocation7 + $0x168] sm:$0xff] 0.0
      %91 = vst [vmem:[#allocation7 + $0x170] sm:$0xff] 0.0
      %92 = vst [vmem:[#allocation7 + $0x178] sm:$0xff] 0.0
      %93 = vst [vmem:[#allocation7 + $0x180] sm:$0xff] 0.0
      %94 = vst [vmem:[#allocation7 + $0x188] sm:$0xff] 0.0
      %95 = vst [vmem:[#allocation7 + $0x190] sm:$0xff] 0.0
      %96 = vst [vmem:[#allocation7 + $0x198] sm:$0xff] 0.0
      %97 = vst [vmem:[#allocation7 + $0x1a0] sm:$0xff] 0.0
      %98 = vst [vmem:[#allocation7 + $0x1a8] sm:$0xff] 0.0
      %99 = vst [vmem:[#allocation7 + $0x1b0] sm:$0xff] 0.0
      %100 = vst [vmem:[#allocation7 + $0x1b8] sm:$0xff] 0.0
      %101 = vst [vmem:[#allocation7 + $0x1c0] sm:$0xff] 0.0
      %102 = vst [vmem:[#allocation7 + $0x1c8] sm:$0xff] 0.0
      %103 = vst [vmem:[#allocation7 + $0x1d0] sm:$0xff] 0.0
      %104 = vst [vmem:[#allocation7 + $0x1d8] sm:$0xff] 0.0
      %105 = vst [vmem:[#allocation7 + $0x1e0] sm:$0xff] 0.0
      %106 = vst [vmem:[#allocation7 + $0x1e8] sm:$0xff] 0.0
      %107 = vst [vmem:[#allocation7 + $0x1f0] sm:$0xff] 0.0
      %108 = vst [vmem:[#allocation7 + $0x1f8] sm:$0xff] 0.0
    $region21: #{tpu_custom_call.1} parent=1 // pred_fallthru
      _
    %s109 = smul.u32 0, 512
    %s110 = sshra.s32 %s109, 3
    %s111 = sand.u32 %s109, 7
    %s112 = smul.addr %s110, 4
    %s113 = scalar_lea.vmem [#allocation5], %s112
    %v114 = vld [vmem:[%s113] sm:$0xf]
    %v115 = vld [vmem:[%s113 + $0x4] sm:$0xf]
    %v116 = vld [vmem:[%s113 + $0x8] sm:$0xf]
    %v117 = vld [vmem:[%s113 + $0xc] sm:$0xf]
    %v118 = vld [vmem:[%s113 + $0x10] sm:$0xf]
    %v119 = vld [vmem:[%s113 + $0x14] sm:$0xf]
    %v120 = vld [vmem:[%s113 + $0x18] sm:$0xf]
    %v121 = vld [vmem:[%s113 + $0x1c] sm:$0xf]
    %v122 = vld [vmem:[%s113 + $0x20] sm:$0xf]
    %v123 = vld [vmem:[%s113 + $0x24] sm:$0xf]
    %v124 = vld [vmem:[%s113 + $0x28] sm:$0xf]
    %v125 = vld [vmem:[%s113 + $0x2c] sm:$0xf]
    %v126 = vld [vmem:[%s113 + $0x30] sm:$0xf]
    %v127 = vld [vmem:[%s113 + $0x34] sm:$0xf]
    %v128 = vld [vmem:[%s113 + $0x38] sm:$0xf]
    %v129 = vld [vmem:[%s113 + $0x3c] sm:$0xf]
    %v130 = vld [vmem:[%s113 + $0x40] sm:$0xf]
    %v131 = vld [vmem:[%s113 + $0x44] sm:$0xf]
    %v132 = vld [vmem:[%s113 + $0x48] sm:$0xf]
    %v133 = vld [vmem:[%s113 + $0x4c] sm:$0xf]
    %v134 = vld [vmem:[%s113 + $0x50] sm:$0xf]
    %v135 = vld [vmem:[%s113 + $0x54] sm:$0xf]
    %v136 = vld [vmem:[%s113 + $0x58] sm:$0xf]
    %v137 = vld [vmem:[%s113 + $0x5c] sm:$0xf]
    %v138 = vld [vmem:[%s113 + $0x60] sm:$0xf]
    %v139 = vld [vmem:[%s113 + $0x64] sm:$0xf]
    %v140 = vld [vmem:[%s113 + $0x68] sm:$0xf]
    %v141 = vld [vmem:[%s113 + $0x6c] sm:$0xf]
    %v142 = vld [vmem:[%s113 + $0x70] sm:$0xf]
    %v143 = vld [vmem:[%s113 + $0x74] sm:$0xf]
    %v144 = vld [vmem:[%s113 + $0x78] sm:$0xf]
    %v145 = vld [vmem:[%s113 + $0x7c] sm:$0xf]
    %v146 = vld [vmem:[%s113 + $0x80] sm:$0xf]
    %v147 = vld [vmem:[%s113 + $0x84] sm:$0xf]
    %v148 = vld [vmem:[%s113 + $0x88] sm:$0xf]
    %v149 = vld [vmem:[%s113 + $0x8c] sm:$0xf]
    %v150 = vld [vmem:[%s113 + $0x90] sm:$0xf]
    %v151 = vld [vmem:[%s113 + $0x94] sm:$0xf]
    %v152 = vld [vmem:[%s113 + $0x98] sm:$0xf]
    %v153 = vld [vmem:[%s113 + $0x9c] sm:$0xf]
    %v154 = vld [vmem:[%s113 + $0xa0] sm:$0xf]
    %v155 = vld [vmem:[%s113 + $0xa4] sm:$0xf]
    %v156 = vld [vmem:[%s113 + $0xa8] sm:$0xf]
    %v157 = vld [vmem:[%s113 + $0xac] sm:$0xf]
    %v158 = vld [vmem:[%s113 + $0xb0] sm:$0xf]
    %v159 = vld [vmem:[%s113 + $0xb4] sm:$0xf]
    %v160 = vld [vmem:[%s113 + $0xb8] sm:$0xf]
    %v161 = vld [vmem:[%s113 + $0xbc] sm:$0xf]
    %v162 = vld [vmem:[%s113 + $0xc0] sm:$0xf]
    %v163 = vld [vmem:[%s113 + $0xc4] sm:$0xf]
    %v164 = vld [vmem:[%s113 + $0xc8] sm:$0xf]
    %v165 = vld [vmem:[%s113 + $0xcc] sm:$0xf]
    %v166 = vld [vmem:[%s113 + $0xd0] sm:$0xf]
    %v167 = vld [vmem:[%s113 + $0xd4] sm:$0xf]
    %v168 = vld [vmem:[%s113 + $0xd8] sm:$0xf]
    %v169 = vld [vmem:[%s113 + $0xdc] sm:$0xf]
    %v170 = vld [vmem:[%s113 + $0xe0] sm:$0xf]
    %v171 = vld [vmem:[%s113 + $0xe4] sm:$0xf]
    %v172 = vld [vmem:[%s113 + $0xe8] sm:$0xf]
    %v173 = vld [vmem:[%s113 + $0xec] sm:$0xf]
    %v174 = vld [vmem:[%s113 + $0xf0] sm:$0xf]
    %v175 = vld [vmem:[%s113 + $0xf4] sm:$0xf]
    %v176 = vld [vmem:[%s113 + $0xf8] sm:$0xf]
    %v177 = vld [vmem:[%s113 + $0xfc] sm:$0xf]
    %v178 = vld [vmem:[#allocation7] sm:$0xff]
    %v179 = vld [vmem:[#allocation7 + $0x8] sm:$0xff]
    %v180 = vld [vmem:[#allocation7 + $0x10] sm:$0xff]
    %v181 = vld [vmem:[#allocation7 + $0x18] sm:$0xff]
    %v182 = vld [vmem:[#allocation7 + $0x20] sm:$0xff]
    %v183 = vld [vmem:[#allocation7 + $0x28] sm:$0xff]
    %v184 = vld [vmem:[#allocation7 + $0x30] sm:$0xff]
    %v185 = vld [vmem:[#allocation7 + $0x38] sm:$0xff]
    %v186 = vld [vmem:[#allocation7 + $0x40] sm:$0xff]
    %v187 = vld [vmem:[#allocation7 + $0x48] sm:$0xff]
    %v188 = vld [vmem:[#allocation7 + $0x50] sm:$0xff]
    %v189 = vld [vmem:[#allocation7 + $0x58] sm:$0xff]
    %v190 = vld [vmem:[#allocation7 + $0x60] sm:$0xff]
    %v191 = vld [vmem:[#allocation7 + $0x68] sm:$0xff]
    %v192 = vld [vmem:[#allocation7 + $0x70] sm:$0xff]
    %v193 = vld [vmem:[#allocation7 + $0x78] sm:$0xff]
    %v194 = vld [vmem:[#allocation7 + $0x80] sm:$0xff]
    %v195 = vld [vmem:[#allocation7 + $0x88] sm:$0xff]
    %v196 = vld [vmem:[#allocation7 + $0x90] sm:$0xff]
    %v197 = vld [vmem:[#allocation7 + $0x98] sm:$0xff]
    %v198 = vld [vmem:[#allocation7 + $0xa0] sm:$0xff]
    %v199 = vld [vmem:[#allocation7 + $0xa8] sm:$0xff]
    %v200 = vld [vmem:[#allocation7 + $0xb0] sm:$0xff]
    %v201 = vld [vmem:[#allocation7 + $0xb8] sm:$0xff]
    %v202 = vld [vmem:[#allocation7 + $0xc0] sm:$0xff]
    %v203 = vld [vmem:[#allocation7 + $0xc8] sm:$0xff]
    %v204 = vld [vmem:[#allocation7 + $0xd0] sm:$0xff]
    %v205 = vld [vmem:[#allocation7 + $0xd8] sm:$0xff]
    %v206 = vld [vmem:[#allocation7 + $0xe0] sm:$0xff]
    %v207 = vld [vmem:[#allocation7 + $0xe8] sm:$0xff]
    %v208 = vld [vmem:[#allocation7 + $0xf0] sm:$0xff]
    %v209 = vld [vmem:[#allocation7 + $0xf8] sm:$0xff]
    %v210 = vld [vmem:[#allocation7 + $0x100] sm:$0xff]
    %v211 = vld [vmem:[#allocation7 + $0x108] sm:$0xff]
    %v212 = vld [vmem:[#allocation7 + $0x110] sm:$0xff]
    %v213 = vld [vmem:[#allocation7 + $0x118] sm:$0xff]
    %v214 = vld [vmem:[#allocation7 + $0x120] sm:$0xff]
    %v215 = vld [vmem:[#allocation7 + $0x128] sm:$0xff]
    %v216 = vld [vmem:[#allocation7 + $0x130] sm:$0xff]
    %v217 = vld [vmem:[#allocation7 + $0x138] sm:$0xff]
    %v218 = vld [vmem:[#allocation7 + $0x140] sm:$0xff]
    %v219 = vld [vmem:[#allocation7 + $0x148] sm:$0xff]
    %v220 = vld [vmem:[#allocation7 + $0x150] sm:$0xff]
    %v221 = vld [vmem:[#allocation7 + $0x158] sm:$0xff]
    %v222 = vld [vmem:[#allocation7 + $0x160] sm:$0xff]
    %v223 = vld [vmem:[#allocation7 + $0x168] sm:$0xff]
    %v224 = vld [vmem:[#allocation7 + $0x170] sm:$0xff]
    %v225 = vld [vmem:[#allocation7 + $0x178] sm:$0xff]
    %v226 = vld [vmem:[#allocation7 + $0x180] sm:$0xff]
    %v227 = vld [vmem:[#allocation7 + $0x188] sm:$0xff]
    %v228 = vld [vmem:[#allocation7 + $0x190] sm:$0xff]
    %v229 = vld [vmem:[#allocation7 + $0x198] sm:$0xff]
    %v230 = vld [vmem:[#allocation7 + $0x1a0] sm:$0xff]
    %v231 = vld [vmem:[#allocation7 + $0x1a8] sm:$0xff]
    %v232 = vld [vmem:[#allocation7 + $0x1b0] sm:$0xff]
    %v233 = vld [vmem:[#allocation7 + $0x1b8] sm:$0xff]
    %v234 = vld [vmem:[#allocation7 + $0x1c0] sm:$0xff]
    %v235 = vld [vmem:[#allocation7 + $0x1c8] sm:$0xff]
    %v236 = vld [vmem:[#allocation7 + $0x1d0] sm:$0xff]
    %v237 = vld [vmem:[#allocation7 + $0x1d8] sm:$0xff]
    %v238 = vld [vmem:[#allocation7 + $0x1e0] sm:$0xff]
    %v239 = vld [vmem:[#allocation7 + $0x1e8] sm:$0xff]
    %v240 = vld [vmem:[#allocation7 + $0x1f0] sm:$0xff]
    %v241 = vld [vmem:[#allocation7 + $0x1f8] sm:$0xff]
    %v242 = vld [vmem:[#allocation2] sm:$0xff]
    %v243 = vld [vmem:[#allocation2 + $0x8] sm:$0xff]
    %v244 = vld [vmem:[#allocation2 + $0x10] sm:$0xff]
    %v245 = vld [vmem:[#allocation2 + $0x18] sm:$0xff]
    %v246 = vld [vmem:[#allocation2 + $0x20] sm:$0xff]
    %v247 = vld [vmem:[#allocation2 + $0x28] sm:$0xff]
    %v248 = vld [vmem:[#allocation2 + $0x30] sm:$0xff]
    %v249 = vld [vmem:[#allocation2 + $0x38] sm:$0xff]
    %v250 = vld [vmem:[#allocation2 + $0x40] sm:$0xff]
    %v251 = vld [vmem:[#allocation2 + $0x48] sm:$0xff]
    %v252 = vld [vmem:[#allocation2 + $0x50] sm:$0xff]
    %v253 = vld [vmem:[#allocation2 + $0x58] sm:$0xff]
    %v254 = vld [vmem:[#allocation2 + $0x60] sm:$0xff]
    %v255 = vld [vmem:[#allocation2 + $0x68] sm:$0xff]
    %v256 = vld [vmem:[#allocation2 + $0x70] sm:$0xff]
    %v257 = vld [vmem:[#allocation2 + $0x78] sm:$0xff]
    %v258 = vld [vmem:[#allocation2 + $0x80] sm:$0xff]
    %v259 = vld [vmem:[#allocation2 + $0x88] sm:$0xff]
    %v260 = vld [vmem:[#allocation2 + $0x90] sm:$0xff]
    %v261 = vld [vmem:[#allocation2 + $0x98] sm:$0xff]
    %v262 = vld [vmem:[#allocation2 + $0xa0] sm:$0xff]
    %v263 = vld [vmem:[#allocation2 + $0xa8] sm:$0xff]
    %v264 = vld [vmem:[#allocation2 + $0xb0] sm:$0xff]
    %v265 = vld [vmem:[#allocation2 + $0xb8] sm:$0xff]
    %v266 = vld [vmem:[#allocation2 + $0xc0] sm:$0xff]
    %v267 = vld [vmem:[#allocation2 + $0xc8] sm:$0xff]
    %v268 = vld [vmem:[#allocation2 + $0xd0] sm:$0xff]
    %v269 = vld [vmem:[#allocation2 + $0xd8] sm:$0xff]
    %v270 = vld [vmem:[#allocation2 + $0xe0] sm:$0xff]
    %v271 = vld [vmem:[#allocation2 + $0xe8] sm:$0xff]
    %v272 = vld [vmem:[#allocation2 + $0xf0] sm:$0xff]
    %v273 = vld [vmem:[#allocation2 + $0xf8] sm:$0xff]
    %v274 = vld [vmem:[#allocation2 + $0x100] sm:$0xff]
    %v275 = vld [vmem:[#allocation2 + $0x108] sm:$0xff]
    %v276 = vld [vmem:[#allocation2 + $0x110] sm:$0xff]
    %v277 = vld [vmem:[#allocation2 + $0x118] sm:$0xff]
    %v278 = vld [vmem:[#allocation2 + $0x120] sm:$0xff]
    %v279 = vld [vmem:[#allocation2 + $0x128] sm:$0xff]
    %v280 = vld [vmem:[#allocation2 + $0x130] sm:$0xff]
    %v281 = vld [vmem:[#allocation2 + $0x138] sm:$0xff]
    %v282 = vld [vmem:[#allocation2 + $0x140] sm:$0xff]
    %v283 = vld [vmem:[#allocation2 + $0x148] sm:$0xff]
    %v284 = vld [vmem:[#allocation2 + $0x150] sm:$0xff]
    %v285 = vld [vmem:[#allocation2 + $0x158] sm:$0xff]
    %v286 = vld [vmem:[#allocation2 + $0x160] sm:$0xff]
    %v287 = vld [vmem:[#allocation2 + $0x168] sm:$0xff]
    %v288 = vld [vmem:[#allocation2 + $0x170] sm:$0xff]
    %v289 = vld [vmem:[#allocation2 + $0x178] sm:$0xff]
    %v290 = vld [vmem:[#allocation2 + $0x180] sm:$0xff]
    %v291 = vld [vmem:[#allocation2 + $0x188] sm:$0xff]
    %v292 = vld [vmem:[#allocation2 + $0x190] sm:$0xff]
    %v293 = vld [vmem:[#allocation2 + $0x198] sm:$0xff]
    %v294 = vld [vmem:[#allocation2 + $0x1a0] sm:$0xff]
    %v295 = vld [vmem:[#allocation2 + $0x1a8] sm:$0xff]
    %v296 = vld [vmem:[#allocation2 + $0x1b0] sm:$0xff]
    %v297 = vld [vmem:[#allocation2 + $0x1b8] sm:$0xff]
    %v298 = vld [vmem:[#allocation2 + $0x1c0] sm:$0xff]
    %v299 = vld [vmem:[#allocation2 + $0x1c8] sm:$0xff]
    %v300 = vld [vmem:[#allocation2 + $0x1d0] sm:$0xff]
    %v301 = vld [vmem:[#allocation2 + $0x1d8] sm:$0xff]
    %v302 = vld [vmem:[#allocation2 + $0x1e0] sm:$0xff]
    %v303 = vld [vmem:[#allocation2 + $0x1e8] sm:$0xff]
    %v304 = vld [vmem:[#allocation2 + $0x1f0] sm:$0xff]
    %v305 = vld [vmem:[#allocation2 + $0x1f8] sm:$0xff]
    %v306 = vld [vmem:[#allocation2 + $0x200] sm:$0xff]
    %v307 = vld [vmem:[#allocation2 + $0x208] sm:$0xff]
    %v308 = vld [vmem:[#allocation2 + $0x210] sm:$0xff]
    %v309 = vld [vmem:[#allocation2 + $0x218] sm:$0xff]
    %v310 = vld [vmem:[#allocation2 + $0x220] sm:$0xff]
    %v311 = vld [vmem:[#allocation2 + $0x228] sm:$0xff]
    %v312 = vld [vmem:[#allocation2 + $0x230] sm:$0xff]
    %v313 = vld [vmem:[#allocation2 + $0x238] sm:$0xff]
    %v314 = vld [vmem:[#allocation2 + $0x240] sm:$0xff]
    %v315 = vld [vmem:[#allocation2 + $0x248] sm:$0xff]
    %v316 = vld [vmem:[#allocation2 + $0x250] sm:$0xff]
    %v317 = vld [vmem:[#allocation2 + $0x258] sm:$0xff]
    %v318 = vld [vmem:[#allocation2 + $0x260] sm:$0xff]
    %v319 = vld [vmem:[#allocation2 + $0x268] sm:$0xff]
    %v320 = vld [vmem:[#allocation2 + $0x270] sm:$0xff]
    %v321 = vld [vmem:[#allocation2 + $0x278] sm:$0xff]
    %v322 = vld [vmem:[#allocation2 + $0x280] sm:$0xff]
    %v323 = vld [vmem:[#allocation2 + $0x288] sm:$0xff]
    %v324 = vld [vmem:[#allocation2 + $0x290] sm:$0xff]
    %v325 = vld [vmem:[#allocation2 + $0x298] sm:$0xff]
    %v326 = vld [vmem:[#allocation2 + $0x2a0] sm:$0xff]
    %v327 = vld [vmem:[#allocation2 + $0x2a8] sm:$0xff]
    %v328 = vld [vmem:[#allocation2 + $0x2b0] sm:$0xff]
    %v329 = vld [vmem:[#allocation2 + $0x2b8] sm:$0xff]
    %v330 = vld [vmem:[#allocation2 + $0x2c0] sm:$0xff]
    %v331 = vld [vmem:[#allocation2 + $0x2c8] sm:$0xff]
    %v332 = vld [vmem:[#allocation2 + $0x2d0] sm:$0xff]
    %v333 = vld [vmem:[#allocation2 + $0x2d8] sm:$0xff]
    %v334 = vld [vmem:[#allocation2 + $0x2e0] sm:$0xff]
    %v335 = vld [vmem:[#allocation2 + $0x2e8] sm:$0xff]
    %v336 = vld [vmem:[#allocation2 + $0x2f0] sm:$0xff]
    %v337 = vld [vmem:[#allocation2 + $0x2f8] sm:$0xff]
    %v338 = vld [vmem:[#allocation2 + $0x300] sm:$0xff]
    %v339 = vld [vmem:[#allocation2 + $0x308] sm:$0xff]
    %v340 = vld [vmem:[#allocation2 + $0x310] sm:$0xff]
    %v341 = vld [vmem:[#allocation2 + $0x318] sm:$0xff]
    %v342 = vld [vmem:[#allocation2 + $0x320] sm:$0xff]
    %v343 = vld [vmem:[#allocation2 + $0x328] sm:$0xff]
    %v344 = vld [vmem:[#allocation2 + $0x330] sm:$0xff]
    %v345 = vld [vmem:[#allocation2 + $0x338] sm:$0xff]
    %v346 = vld [vmem:[#allocation2 + $0x340] sm:$0xff]
    %v347 = vld [vmem:[#allocation2 + $0x348] sm:$0xff]
    %v348 = vld [vmem:[#allocation2 + $0x350] sm:$0xff]
    %v349 = vld [vmem:[#allocation2 + $0x358] sm:$0xff]
    %v350 = vld [vmem:[#allocation2 + $0x360] sm:$0xff]
    %v351 = vld [vmem:[#allocation2 + $0x368] sm:$0xff]
    %v352 = vld [vmem:[#allocation2 + $0x370] sm:$0xff]
    %v353 = vld [vmem:[#allocation2 + $0x378] sm:$0xff]
    %v354 = vld [vmem:[#allocation2 + $0x380] sm:$0xff]
    %v355 = vld [vmem:[#allocation2 + $0x388] sm:$0xff]
    %v356 = vld [vmem:[#allocation2 + $0x390] sm:$0xff]
    %v357 = vld [vmem:[#allocation2 + $0x398] sm:$0xff]
    %v358 = vld [vmem:[#allocation2 + $0x3a0] sm:$0xff]
    %v359 = vld [vmem:[#allocation2 + $0x3a8] sm:$0xff]
    %v360 = vld [vmem:[#allocation2 + $0x3b0] sm:$0xff]
    %v361 = vld [vmem:[#allocation2 + $0x3b8] sm:$0xff]
    %v362 = vld [vmem:[#allocation2 + $0x3c0] sm:$0xff]
    %v363 = vld [vmem:[#allocation2 + $0x3c8] sm:$0xff]
    %v364 = vld [vmem:[#allocation2 + $0x3d0] sm:$0xff]
    %v365 = vld [vmem:[#allocation2 + $0x3d8] sm:$0xff]
    %v366 = vld [vmem:[#allocation2 + $0x3e0] sm:$0xff]
    %v367 = vld [vmem:[#allocation2 + $0x3e8] sm:$0xff]
    %v368 = vld [vmem:[#allocation2 + $0x3f0] sm:$0xff]
    %v369 = vld [vmem:[#allocation2 + $0x3f8] sm:$0xff]
    %v498 = vunpack.c.l.b16 %v242
    %v499 = vunpack.c.h.b16 %v242
    %v500 = vunpack.c.l.b16 %v243
    %v501 = vunpack.c.h.b16 %v243
    %v502 = vunpack.c.l.b16 %v244
    %v503 = vunpack.c.h.b16 %v244
    %v504 = vunpack.c.l.b16 %v245
    %v505 = vunpack.c.h.b16 %v245
    %v506 = vunpack.c.l.b16 %v246
    %v507 = vunpack.c.h.b16 %v246
    %v508 = vunpack.c.l.b16 %v247
    %v509 = vunpack.c.h.b16 %v247
    %v510 = vunpack.c.l.b16 %v248
    %v511 = vunpack.c.h.b16 %v248
    %v512 = vunpack.c.l.b16 %v249
    %v513 = vunpack.c.h.b16 %v249
    %v514 = vunpack.c.l.b16 %v250
    %v515 = vunpack.c.h.b16 %v250
    %v516 = vunpack.c.l.b16 %v251
    %v517 = vunpack.c.h.b16 %v251
    %v518 = vunpack.c.l.b16 %v252
    %v519 = vunpack.c.h.b16 %v252
    %v520 = vunpack.c.l.b16 %v253
    %v521 = vunpack.c.h.b16 %v253
    %v522 = vunpack.c.l.b16 %v254
    %v523 = vunpack.c.h.b16 %v254
    %v524 = vunpack.c.l.b16 %v255
    %v525 = vunpack.c.h.b16 %v255
    %v526 = vunpack.c.l.b16 %v256
    %v527 = vunpack.c.h.b16 %v256
    %v528 = vunpack.c.l.b16 %v257
    %v529 = vunpack.c.h.b16 %v257
    %v530 = vunpack.c.l.b16 %v258
    %v531 = vunpack.c.h.b16 %v258
    %v532 = vunpack.c.l.b16 %v259
    %v533 = vunpack.c.h.b16 %v259
    %v534 = vunpack.c.l.b16 %v260
    %v535 = vunpack.c.h.b16 %v260
    %v536 = vunpack.c.l.b16 %v261
    %v537 = vunpack.c.h.b16 %v261
    %v538 = vunpack.c.l.b16 %v262
    %v539 = vunpack.c.h.b16 %v262
    %v540 = vunpack.c.l.b16 %v263
    %v541 = vunpack.c.h.b16 %v263
    %v542 = vunpack.c.l.b16 %v264
    %v543 = vunpack.c.h.b16 %v264
    %v544 = vunpack.c.l.b16 %v265
    %v545 = vunpack.c.h.b16 %v265
    %v546 = vunpack.c.l.b16 %v266
    %v547 = vunpack.c.h.b16 %v266
    %v548 = vunpack.c.l.b16 %v267
    %v549 = vunpack.c.h.b16 %v267
    %v550 = vunpack.c.l.b16 %v268
    %v551 = vunpack.c.h.b16 %v268
    %v552 = vunpack.c.l.b16 %v269
    %v553 = vunpack.c.h.b16 %v269
    %v554 = vunpack.c.l.b16 %v270
    %v555 = vunpack.c.h.b16 %v270
    %v556 = vunpack.c.l.b16 %v271
    %v557 = vunpack.c.h.b16 %v271
    %v558 = vunpack.c.l.b16 %v272
    %v559 = vunpack.c.h.b16 %v272
    %v560 = vunpack.c.l.b16 %v273
    %v561 = vunpack.c.h.b16 %v273
    %v562 = vunpack.c.l.b16 %v274
    %v563 = vunpack.c.h.b16 %v274
    %v564 = vunpack.c.l.b16 %v275
    %v565 = vunpack.c.h.b16 %v275
    %v566 = vunpack.c.l.b16 %v276
    %v567 = vunpack.c.h.b16 %v276
    %v568 = vunpack.c.l.b16 %v277
    %v569 = vunpack.c.h.b16 %v277
    %v570 = vunpack.c.l.b16 %v278
    %v571 = vunpack.c.h.b16 %v278
    %v572 = vunpack.c.l.b16 %v279
    %v573 = vunpack.c.h.b16 %v279
    %v574 = vunpack.c.l.b16 %v280
    %v575 = vunpack.c.h.b16 %v280
    %v576 = vunpack.c.l.b16 %v281
    %v577 = vunpack.c.h.b16 %v281
    %v578 = vunpack.c.l.b16 %v282
    %v579 = vunpack.c.h.b16 %v282
    %v580 = vunpack.c.l.b16 %v283
    %v581 = vunpack.c.h.b16 %v283
    %v582 = vunpack.c.l.b16 %v284
    %v583 = vunpack.c.h.b16 %v284
    %v584 = vunpack.c.l.b16 %v285
    %v585 = vunpack.c.h.b16 %v285
    %v586 = vunpack.c.l.b16 %v286
    %v587 = vunpack.c.h.b16 %v286
    %v588 = vunpack.c.l.b16 %v287
    %v589 = vunpack.c.h.b16 %v287
    %v590 = vunpack.c.l.b16 %v288
    %v591 = vunpack.c.h.b16 %v288
    %v592 = vunpack.c.l.b16 %v289
    %v593 = vunpack.c.h.b16 %v289
    %v594 = vunpack.c.l.b16 %v290
    %v595 = vunpack.c.h.b16 %v290
    %v596 = vunpack.c.l.b16 %v291
    %v597 = vunpack.c.h.b16 %v291
    %v598 = vunpack.c.l.b16 %v292
    %v599 = vunpack.c.h.b16 %v292
    %v600 = vunpack.c.l.b16 %v293
    %v601 = vunpack.c.h.b16 %v293
    %v602 = vunpack.c.l.b16 %v294
    %v603 = vunpack.c.h.b16 %v294
    %v604 = vunpack.c.l.b16 %v295
    %v605 = vunpack.c.h.b16 %v295
    %v606 = vunpack.c.l.b16 %v296
    %v607 = vunpack.c.h.b16 %v296
    %v608 = vunpack.c.l.b16 %v297
    %v609 = vunpack.c.h.b16 %v297
    %v610 = vunpack.c.l.b16 %v298
    %v611 = vunpack.c.h.b16 %v298
    %v612 = vunpack.c.l.b16 %v299
    %v613 = vunpack.c.h.b16 %v299
    %v614 = vunpack.c.l.b16 %v300
    %v615 = vunpack.c.h.b16 %v300
    %v616 = vunpack.c.l.b16 %v301
    %v617 = vunpack.c.h.b16 %v301
    %v618 = vunpack.c.l.b16 %v302
    %v619 = vunpack.c.h.b16 %v302
    %v620 = vunpack.c.l.b16 %v303
    %v621 = vunpack.c.h.b16 %v303
    %v622 = vunpack.c.l.b16 %v304
    %v623 = vunpack.c.h.b16 %v304
    %v624 = vunpack.c.l.b16 %v305
    %v625 = vunpack.c.h.b16 %v305
    %v626 = vunpack.c.l.b16 %v306
    %v627 = vunpack.c.h.b16 %v306
    %v628 = vunpack.c.l.b16 %v307
    %v629 = vunpack.c.h.b16 %v307
    %v630 = vunpack.c.l.b16 %v308
    %v631 = vunpack.c.h.b16 %v308
    %v632 = vunpack.c.l.b16 %v309
    %v633 = vunpack.c.h.b16 %v309
    %v634 = vunpack.c.l.b16 %v310
    %v635 = vunpack.c.h.b16 %v310
    %v636 = vunpack.c.l.b16 %v311
    %v637 = vunpack.c.h.b16 %v311
    %v638 = vunpack.c.l.b16 %v312
    %v639 = vunpack.c.h.b16 %v312
    %v640 = vunpack.c.l.b16 %v313
    %v641 = vunpack.c.h.b16 %v313
    %v642 = vunpack.c.l.b16 %v314
    %v643 = vunpack.c.h.b16 %v314
    %v644 = vunpack.c.l.b16 %v315
    %v645 = vunpack.c.h.b16 %v315
    %v646 = vunpack.c.l.b16 %v316
    %v647 = vunpack.c.h.b16 %v316
    %v648 = vunpack.c.l.b16 %v317
    %v649 = vunpack.c.h.b16 %v317
    %v650 = vunpack.c.l.b16 %v318
    %v651 = vunpack.c.h.b16 %v318
    %v652 = vunpack.c.l.b16 %v319
    %v653 = vunpack.c.h.b16 %v319
    %v654 = vunpack.c.l.b16 %v320
    %v655 = vunpack.c.h.b16 %v320
    %v656 = vunpack.c.l.b16 %v321
    %v657 = vunpack.c.h.b16 %v321
    %v658 = vunpack.c.l.b16 %v322
    %v659 = vunpack.c.h.b16 %v322
    %v660 = vunpack.c.l.b16 %v323
    %v661 = vunpack.c.h.b16 %v323
    %v662 = vunpack.c.l.b16 %v324
    %v663 = vunpack.c.h.b16 %v324
    %v664 = vunpack.c.l.b16 %v325
    %v665 = vunpack.c.h.b16 %v325
    %v666 = vunpack.c.l.b16 %v326
    %v667 = vunpack.c.h.b16 %v326
    %v668 = vunpack.c.l.b16 %v327
    %v669 = vunpack.c.h.b16 %v327
    %v670 = vunpack.c.l.b16 %v328
    %v671 = vunpack.c.h.b16 %v328
    %v672 = vunpack.c.l.b16 %v329
    %v673 = vunpack.c.h.b16 %v329
    %v674 = vunpack.c.l.b16 %v330
    %v675 = vunpack.c.h.b16 %v330
    %v676 = vunpack.c.l.b16 %v331
    %v677 = vunpack.c.h.b16 %v331
    %v678 = vunpack.c.l.b16 %v332
    %v679 = vunpack.c.h.b16 %v332
    %v680 = vunpack.c.l.b16 %v333
    %v681 = vunpack.c.h.b16 %v333
    %v682 = vunpack.c.l.b16 %v334
    %v683 = vunpack.c.h.b16 %v334
    %v684 = vunpack.c.l.b16 %v335
    %v685 = vunpack.c.h.b16 %v335
    %v686 = vunpack.c.l.b16 %v336
    %v687 = vunpack.c.h.b16 %v336
    %v688 = vunpack.c.l.b16 %v337
    %v689 = vunpack.c.h.b16 %v337
    %v690 = vunpack.c.l.b16 %v338
    %v691 = vunpack.c.h.b16 %v338
    %v692 = vunpack.c.l.b16 %v339
    %v693 = vunpack.c.h.b16 %v339
    %v694 = vunpack.c.l.b16 %v340
    %v695 = vunpack.c.h.b16 %v340
    %v696 = vunpack.c.l.b16 %v341
    %v697 = vunpack.c.h.b16 %v341
    %v698 = vunpack.c.l.b16 %v342
    %v699 = vunpack.c.h.b16 %v342
    %v700 = vunpack.c.l.b16 %v343
    %v701 = vunpack.c.h.b16 %v343
    %v702 = vunpack.c.l.b16 %v344
    %v703 = vunpack.c.h.b16 %v344
    %v704 = vunpack.c.l.b16 %v345
    %v705 = vunpack.c.h.b16 %v345
    %v706 = vunpack.c.l.b16 %v346
    %v707 = vunpack.c.h.b16 %v346
    %v708 = vunpack.c.l.b16 %v347
    %v709 = vunpack.c.h.b16 %v347
    %v710 = vunpack.c.l.b16 %v348
    %v711 = vunpack.c.h.b16 %v348
    %v712 = vunpack.c.l.b16 %v349
    %v713 = vunpack.c.h.b16 %v349
    %v714 = vunpack.c.l.b16 %v350
    %v715 = vunpack.c.h.b16 %v350
    %v716 = vunpack.c.l.b16 %v351
    %v717 = vunpack.c.h.b16 %v351
    %v718 = vunpack.c.l.b16 %v352
    %v719 = vunpack.c.h.b16 %v352
    %v720 = vunpack.c.l.b16 %v353
    %v721 = vunpack.c.h.b16 %v353
    %v722 = vunpack.c.l.b16 %v354
    %v723 = vunpack.c.h.b16 %v354
    %v724 = vunpack.c.l.b16 %v355
    %v725 = vunpack.c.h.b16 %v355
    %v726 = vunpack.c.l.b16 %v356
    %v727 = vunpack.c.h.b16 %v356
    %v728 = vunpack.c.l.b16 %v357
    %v729 = vunpack.c.h.b16 %v357
    %v730 = vunpack.c.l.b16 %v358
    %v731 = vunpack.c.h.b16 %v358
    %v732 = vunpack.c.l.b16 %v359
    %v733 = vunpack.c.h.b16 %v359
    %v734 = vunpack.c.l.b16 %v360
    %v735 = vunpack.c.h.b16 %v360
    %v736 = vunpack.c.l.b16 %v361
    %v737 = vunpack.c.h.b16 %v361
    %v738 = vunpack.c.l.b16 %v362
    %v739 = vunpack.c.h.b16 %v362
    %v740 = vunpack.c.l.b16 %v363
    %v741 = vunpack.c.h.b16 %v363
    %v742 = vunpack.c.l.b16 %v364
    %v743 = vunpack.c.h.b16 %v364
    %v744 = vunpack.c.l.b16 %v365
    %v745 = vunpack.c.h.b16 %v365
    %v746 = vunpack.c.l.b16 %v366
    %v747 = vunpack.c.h.b16 %v366
    %v748 = vunpack.c.l.b16 %v367
    %v749 = vunpack.c.h.b16 %v367
    %v750 = vunpack.c.l.b16 %v368
    %v751 = vunpack.c.h.b16 %v368
    %v752 = vunpack.c.l.b16 %v369
    %v753 = vunpack.c.h.b16 %v369
    %v754 = vpack.c.b16 %v502, %v498
    %v755 = vpack.c.b16 %v503, %v499
    %v756 = vpack.c.b16 %v504, %v500
    %v757 = vpack.c.b16 %v505, %v501
    %v758 = vpack.c.b16 %v510, %v506
    %v759 = vpack.c.b16 %v511, %v507
    %v760 = vpack.c.b16 %v512, %v508
    %v761 = vpack.c.b16 %v513, %v509
    %v762 = vpack.c.b16 %v518, %v514
    %v763 = vpack.c.b16 %v519, %v515
    %v764 = vpack.c.b16 %v520, %v516
    %v765 = vpack.c.b16 %v521, %v517
    %v766 = vpack.c.b16 %v526, %v522
    %v767 = vpack.c.b16 %v527, %v523
    %v768 = vpack.c.b16 %v528, %v524
    %v769 = vpack.c.b16 %v529, %v525
    %v770 = vpack.c.b16 %v534, %v530
    %v771 = vpack.c.b16 %v535, %v531
    %v772 = vpack.c.b16 %v536, %v532
    %v773 = vpack.c.b16 %v537, %v533
    %v774 = vpack.c.b16 %v542, %v538
    %v775 = vpack.c.b16 %v543, %v539
    %v776 = vpack.c.b16 %v544, %v540
    %v777 = vpack.c.b16 %v545, %v541
    %v778 = vpack.c.b16 %v550, %v546
    %v779 = vpack.c.b16 %v551, %v547
    %v780 = vpack.c.b16 %v552, %v548
    %v781 = vpack.c.b16 %v553, %v549
    %v782 = vpack.c.b16 %v558, %v554
    %v783 = vpack.c.b16 %v559, %v555
    %v784 = vpack.c.b16 %v560, %v556
    %v785 = vpack.c.b16 %v561, %v557
    %v786 = vpack.c.b16 %v566, %v562
    %v787 = vpack.c.b16 %v567, %v563
    %v788 = vpack.c.b16 %v568, %v564
    %v789 = vpack.c.b16 %v569, %v565
    %v790 = vpack.c.b16 %v574, %v570
    %v791 = vpack.c.b16 %v575, %v571
    %v792 = vpack.c.b16 %v576, %v572
    %v793 = vpack.c.b16 %v577, %v573
    %v794 = vpack.c.b16 %v582, %v578
    %v795 = vpack.c.b16 %v583, %v579
    %v796 = vpack.c.b16 %v584, %v580
    %v797 = vpack.c.b16 %v585, %v581
    %v798 = vpack.c.b16 %v590, %v586
    %v799 = vpack.c.b16 %v591, %v587
    %v800 = vpack.c.b16 %v592, %v588
    %v801 = vpack.c.b16 %v593, %v589
    %v802 = vpack.c.b16 %v598, %v594
    %v803 = vpack.c.b16 %v599, %v595
    %v804 = vpack.c.b16 %v600, %v596
    %v805 = vpack.c.b16 %v601, %v597
    %v806 = vpack.c.b16 %v606, %v602
    %v807 = vpack.c.b16 %v607, %v603
    %v808 = vpack.c.b16 %v608, %v604
    %v809 = vpack.c.b16 %v609, %v605
    %v810 = vpack.c.b16 %v614, %v610
    %v811 = vpack.c.b16 %v615, %v611
    %v812 = vpack.c.b16 %v616, %v612
    %v813 = vpack.c.b16 %v617, %v613
    %v814 = vpack.c.b16 %v622, %v618
    %v815 = vpack.c.b16 %v623, %v619
    %v816 = vpack.c.b16 %v624, %v620
    %v817 = vpack.c.b16 %v625, %v621
    %v818 = vpack.c.b16 %v630, %v626
    %v819 = vpack.c.b16 %v631, %v627
    %v820 = vpack.c.b16 %v632, %v628
    %v821 = vpack.c.b16 %v633, %v629
    %v822 = vpack.c.b16 %v638, %v634
    %v823 = vpack.c.b16 %v639, %v635
    %v824 = vpack.c.b16 %v640, %v636
    %v825 = vpack.c.b16 %v641, %v637
    %v826 = vpack.c.b16 %v646, %v642
    %v827 = vpack.c.b16 %v647, %v643
    %v828 = vpack.c.b16 %v648, %v644
    %v829 = vpack.c.b16 %v649, %v645
    %v830 = vpack.c.b16 %v654, %v650
    %v831 = vpack.c.b16 %v655, %v651
    %v832 = vpack.c.b16 %v656, %v652
    %v833 = vpack.c.b16 %v657, %v653
    %v834 = vpack.c.b16 %v662, %v658
    %v835 = vpack.c.b16 %v663, %v659
    %v836 = vpack.c.b16 %v664, %v660
    %v837 = vpack.c.b16 %v665, %v661
    %v838 = vpack.c.b16 %v670, %v666
    %v839 = vpack.c.b16 %v671, %v667
    %v840 = vpack.c.b16 %v672, %v668
    %v841 = vpack.c.b16 %v673, %v669
    %v842 = vpack.c.b16 %v678, %v674
    %v843 = vpack.c.b16 %v679, %v675
    %v844 = vpack.c.b16 %v680, %v676
    %v845 = vpack.c.b16 %v681, %v677
    %v846 = vpack.c.b16 %v686, %v682
    %v847 = vpack.c.b16 %v687, %v683
    %v848 = vpack.c.b16 %v688, %v684
    %v849 = vpack.c.b16 %v689, %v685
    %v850 = vpack.c.b16 %v694, %v690
    %v851 = vpack.c.b16 %v695, %v691
    %v852 = vpack.c.b16 %v696, %v692
    %v853 = vpack.c.b16 %v697, %v693
    %v854 = vpack.c.b16 %v702, %v698
    %v855 = vpack.c.b16 %v703, %v699
    %v856 = vpack.c.b16 %v704, %v700
    %v857 = vpack.c.b16 %v705, %v701
    %v858 = vpack.c.b16 %v710, %v706
    %v859 = vpack.c.b16 %v711, %v707
    %v860 = vpack.c.b16 %v712, %v708
    %v861 = vpack.c.b16 %v713, %v709
    %v862 = vpack.c.b16 %v718, %v714
    %v863 = vpack.c.b16 %v719, %v715
    %v864 = vpack.c.b16 %v720, %v716
    %v865 = vpack.c.b16 %v721, %v717
    %v866 = vpack.c.b16 %v726, %v722
    %v867 = vpack.c.b16 %v727, %v723
    %v868 = vpack.c.b16 %v728, %v724
    %v869 = vpack.c.b16 %v729, %v725
    %v870 = vpack.c.b16 %v734, %v730
    %v871 = vpack.c.b16 %v735, %v731
    %v872 = vpack.c.b16 %v736, %v732
    %v873 = vpack.c.b16 %v737, %v733
    %v874 = vpack.c.b16 %v742, %v738
    %v875 = vpack.c.b16 %v743, %v739
    %v876 = vpack.c.b16 %v744, %v740
    %v877 = vpack.c.b16 %v745, %v741
    %v878 = vpack.c.b16 %v750, %v746
    %v879 = vpack.c.b16 %v751, %v747
    %v880 = vpack.c.b16 %v752, %v748
    %v881 = vpack.c.b16 %v753, %v749
    %v1074 = vunpack.c.l.b16 %v114
    %v1075 = vunpack.c.l.b16 %v115
    %v1076 = vunpack.c.l.b16 %v116
    %v1077 = vunpack.c.l.b16 %v117
    %v1078 = vunpack.c.l.b16 %v118
    %v1079 = vunpack.c.l.b16 %v119
    %v1080 = vunpack.c.l.b16 %v120
    %v1081 = vunpack.c.l.b16 %v121
    %v1082 = vunpack.c.l.b16 %v122
    %v1083 = vunpack.c.l.b16 %v123
    %v1084 = vunpack.c.l.b16 %v124
    %v1085 = vunpack.c.l.b16 %v125
    %v1086 = vunpack.c.l.b16 %v126
    %v1087 = vunpack.c.l.b16 %v127
    %v1088 = vunpack.c.l.b16 %v128
    %v1089 = vunpack.c.l.b16 %v129
    %v1090 = vunpack.c.l.b16 %v130
    %v1091 = vunpack.c.l.b16 %v131
    %v1092 = vunpack.c.l.b16 %v132
    %v1093 = vunpack.c.l.b16 %v133
    %v1094 = vunpack.c.l.b16 %v134
    %v1095 = vunpack.c.l.b16 %v135
    %v1096 = vunpack.c.l.b16 %v136
    %v1097 = vunpack.c.l.b16 %v137
    %v1098 = vunpack.c.l.b16 %v138
    %v1099 = vunpack.c.l.b16 %v139
    %v1100 = vunpack.c.l.b16 %v140
    %v1101 = vunpack.c.l.b16 %v141
    %v1102 = vunpack.c.l.b16 %v142
    %v1103 = vunpack.c.l.b16 %v143
    %v1104 = vunpack.c.l.b16 %v144
    %v1105 = vunpack.c.l.b16 %v145
    %v1106 = vunpack.c.l.b16 %v146
    %v1107 = vunpack.c.l.b16 %v147
    %v1108 = vunpack.c.l.b16 %v148
    %v1109 = vunpack.c.l.b16 %v149
    %v1110 = vunpack.c.l.b16 %v150
    %v1111 = vunpack.c.l.b16 %v151
    %v1112 = vunpack.c.l.b16 %v152
    %v1113 = vunpack.c.l.b16 %v153
    %v1114 = vunpack.c.l.b16 %v154
    %v1115 = vunpack.c.l.b16 %v155
    %v1116 = vunpack.c.l.b16 %v156
    %v1117 = vunpack.c.l.b16 %v157
    %v1118 = vunpack.c.l.b16 %v158
    %v1119 = vunpack.c.l.b16 %v159
    %v1120 = vunpack.c.l.b16 %v160
    %v1121 = vunpack.c.l.b16 %v161
    %v1122 = vunpack.c.l.b16 %v162
    %v1123 = vunpack.c.l.b16 %v163
    %v1124 = vunpack.c.l.b16 %v164
    %v1125 = vunpack.c.l.b16 %v165
    %v1126 = vunpack.c.l.b16 %v166
    %v1127 = vunpack.c.l.b16 %v167
    %v1128 = vunpack.c.l.b16 %v168
    %v1129 = vunpack.c.l.b16 %v169
    %v1130 = vunpack.c.l.b16 %v170
    %v1131 = vunpack.c.l.b16 %v171
    %v1132 = vunpack.c.l.b16 %v172
    %v1133 = vunpack.c.l.b16 %v173
    %v1134 = vunpack.c.l.b16 %v174
    %v1135 = vunpack.c.l.b16 %v175
    %v1136 = vunpack.c.l.b16 %v176
    %v1137 = vunpack.c.l.b16 %v177
    %v1138 = vpack.c.b16 %v1075, %v1074
    %v1139 = vpack.c.b16 %v1077, %v1076
    %v1140 = vpack.c.b16 %v1079, %v1078
    %v1141 = vpack.c.b16 %v1081, %v1080
    %v1142 = vpack.c.b16 %v1083, %v1082
    %v1143 = vpack.c.b16 %v1085, %v1084
    %v1144 = vpack.c.b16 %v1087, %v1086
    %v1145 = vpack.c.b16 %v1089, %v1088
    %v1146 = vpack.c.b16 %v1091, %v1090
    %v1147 = vpack.c.b16 %v1093, %v1092
    %v1148 = vpack.c.b16 %v1095, %v1094
    %v1149 = vpack.c.b16 %v1097, %v1096
    %v1150 = vpack.c.b16 %v1099, %v1098
    %v1151 = vpack.c.b16 %v1101, %v1100
    %v1152 = vpack.c.b16 %v1103, %v1102
    %v1153 = vpack.c.b16 %v1105, %v1104
    %v1154 = vpack.c.b16 %v1107, %v1106
    %v1155 = vpack.c.b16 %v1109, %v1108
    %v1156 = vpack.c.b16 %v1111, %v1110
    %v1157 = vpack.c.b16 %v1113, %v1112
    %v1158 = vpack.c.b16 %v1115, %v1114
    %v1159 = vpack.c.b16 %v1117, %v1116
    %v1160 = vpack.c.b16 %v1119, %v1118
    %v1161 = vpack.c.b16 %v1121, %v1120
    %v1162 = vpack.c.b16 %v1123, %v1122
    %v1163 = vpack.c.b16 %v1125, %v1124
    %v1164 = vpack.c.b16 %v1127, %v1126
    %v1165 = vpack.c.b16 %v1129, %v1128
    %v1166 = vpack.c.b16 %v1131, %v1130
    %v1167 = vpack.c.b16 %v1133, %v1132
    %v1168 = vpack.c.b16 %v1135, %v1134
    %v1169 = vpack.c.b16 %v1137, %v1136
    %1202 = vmatprep.subr.bf16.mxu0 0
    %1203 = vmatpush1.bf16.msra.mxu0 %v1138
    %1204 = vmatprep.subr.bf16.mxu0 0
    %1205 = vmatpush1.bf16.msra.mxu0 %v1139
    %1206 = vmatprep.subr.bf16.mxu0 0
    %1207 = vmatpush1.bf16.msra.mxu0 %v1140
    %1208 = vmatprep.subr.bf16.mxu0 0
    %1209 = vmatpush1.bf16.msra.mxu0 %v1141
    %1210 = vmatprep.subr.bf16.mxu0 0
    %1211 = vmatpush1.bf16.msra.mxu0 %v1142
    %1212 = vmatprep.subr.bf16.mxu0 0
    %1213 = vmatpush1.bf16.msra.mxu0 %v1143
    %1214 = vmatprep.subr.bf16.mxu0 0
    %1215 = vmatpush1.bf16.msra.mxu0 %v1144
    %1216 = vmatprep.subr.bf16.mxu0 0
    %1217 = vmatpush1.bf16.msra.mxu0 %v1145
    %1218 = vmatprep.subr.bf16.mxu0 0
    %1219 = vmatpush1.bf16.msra.mxu0 %v1146
    %1220 = vmatprep.subr.bf16.mxu0 0
    %1221 = vmatpush1.bf16.msra.mxu0 %v1147
    %1222 = vmatprep.subr.bf16.mxu0 0
    %1223 = vmatpush1.bf16.msra.mxu0 %v1148
    %1224 = vmatprep.subr.bf16.mxu0 0
    %1225 = vmatpush1.bf16.msra.mxu0 %v1149
    %1226 = vmatprep.subr.bf16.mxu0 0
    %1227 = vmatpush1.bf16.msra.mxu0 %v1150
    %1228 = vmatprep.subr.bf16.mxu0 0
    %1229 = vmatpush1.bf16.msra.mxu0 %v1151
    %1230 = vmatprep.subr.bf16.mxu0 0
    %1231 = vmatpush1.bf16.msra.mxu0 %v1152
    %1232 = vmatprep.subr.bf16.mxu0 0
    %1233 = vmatpush1.bf16.msra.mxu0 %v1153
    %1234 = vmatprep.mubr.bf16.mxu0 %v755
    %1235 = vmatmul.mubr.bf16.gmra.mrb[0].mxu0 %v754
    %v1236 = vpop.f32.mrb[0].mxu0
    %v1237 = vadd.f32 0.0, %v1236
    %v1238 = vpop.f32.mrb[0].mxu0
    %v1239 = vpop.f32.mrb[0].mxu0
    %v1240 = vadd.f32 0.0, %v1239
    %v1241 = vpop.f32.mrb[0].mxu0
    %1242 = vmatprep.mubr.bf16.mxu0 %v759
    %1243 = vmatmul.mubr.bf16.gmra.mrb[0].mxu0 %v758
    %v1244 = vpop.f32.mrb[0].mxu0
    %v1245 = vadd.f32 0.0, %v1244
    %v1246 = vpop.f32.mrb[0].mxu0
    %v1247 = vpop.f32.mrb[0].mxu0
    %v1248 = vadd.f32 0.0, %v1247
    %v1249 = vpop.f32.mrb[0].mxu0
    %1250 = vmatprep.mubr.bf16.mxu0 %v763
    %1251 = vmatmul.mubr.bf16.gmra.mrb[0].mxu0 %v762
    %v1252 = vpop.f32.mrb[0].mxu0
    %v1253 = vadd.f32 0.0, %v1252
    %v1254 = vpop.f32.mrb[0].mxu0
    %v1255 = vpop.f32.mrb[0].mxu0
    %v1256 = vadd.f32 0.0, %v1255
    %v1257 = vpop.f32.mrb[0].mxu0
    %1258 = vmatprep.mubr.bf16.mxu0 %v767
    %1259 = vmatmul.mubr.bf16.gmra.mrb[0].mxu0 %v766
    %v1260 = vpop.f32.mrb[0].mxu0
    %v1261 = vadd.f32 0.0, %v1260
    %v1262 = vpop.f32.mrb[0].mxu0
    %v1263 = vpop.f32.mrb[0].mxu0
    %v1264 = vadd.f32 0.0, %v1263
    %v1265 = vpop.f32.mrb[0].mxu0
    %1266 = vmatprep.mubr.bf16.mxu0 %v771
    %1267 = vmatmul.mubr.bf16.gmra.mrb[0].mxu0 %v770
    %v1268 = vpop.f32.mrb[0].mxu0
    %v1269 = vadd.f32 0.0, %v1268
    %v1270 = vpop.f32.mrb[0].mxu0
    %v1271 = vpop.f32.mrb[0].mxu0
    %v1272 = vadd.f32 0.0, %v1271
    %v1273 = vpop.f32.mrb[0].mxu0
    %1274 = vmatprep.mubr.bf16.mxu0 %v775
    %1275 = vmatmul.mubr.bf16.gmra.mrb[0].mxu0 %v774
    %v1276 = vpop.f32.mrb[0].mxu0
    %v1277 = vadd.f32 0.0, %v1276
    %v1278 = vpop.f32.mrb[0].mxu0
    %v1279 = vpop.f32.mrb[0].mxu0
    %v1280 = vadd.f32 0.0, %v1279
    %v1281 = vpop.f32.mrb[0].mxu0
    %1282 = vmatprep.mubr.bf16.mxu0 %v779
    %1283 = vmatmul.mubr.bf16.gmra.mrb[0].mxu0 %v778
    %v1284 = vpop.f32.mrb[0].mxu0
    %v1285 = vadd.f32 0.0, %v1284
    %v1286 = vpop.f32.mrb[0].mxu0
    %v1287 = vpop.f32.mrb[0].mxu0
    %v1288 = vadd.f32 0.0, %v1287
    %v1289 = vpop.f32.mrb[0].mxu0
    %1290 = vmatprep.mubr.bf16.mxu0 %v783
    %1291 = vmatmul.mubr.bf16.gmra.mrb[0].mxu0 %v782
    %v1292 = vpop.f32.mrb[0].mxu0
    %v1293 = vadd.f32 0.0, %v1292
    %v1294 = vpop.f32.mrb[0].mxu0
    %v1295 = vpop.f32.mrb[0].mxu0
    %v1296 = vadd.f32 0.0, %v1295
    %v1297 = vpop.f32.mrb[0].mxu0
    %1298 = vmatprep.mubr.bf16.mxu0 %v787
    %1299 = vmatmul.mubr.bf16.gmra.mrb[0].mxu0 %v786
    %v1300 = vpop.f32.mrb[0].mxu0
    %v1301 = vadd.f32 0.0, %v1300
    %v1302 = vpop.f32.mrb[0].mxu0
    %v1303 = vpop.f32.mrb[0].mxu0
    %v1304 = vadd.f32 0.0, %v1303
    %v1305 = vpop.f32.mrb[0].mxu0
    %1306 = vmatprep.mubr.bf16.mxu0 %v791
    %1307 = vmatmul.mubr.bf16.gmra.mrb[0].mxu0 %v790
    %v1308 = vpop.f32.mrb[0].mxu0
    %v1309 = vadd.f32 0.0, %v1308
    %v1310 = vpop.f32.mrb[0].mxu0
    %v1311 = vpop.f32.mrb[0].mxu0
    %v1312 = vadd.f32 0.0, %v1311
    %v1313 = vpop.f32.mrb[0].mxu0
    %1314 = vmatprep.mubr.bf16.mxu0 %v795
    %1315 = vmatmul.mubr.bf16.gmra.mrb[0].mxu0 %v794
    %v1316 = vpop.f32.mrb[0].mxu0
    %v1317 = vadd.f32 0.0, %v1316
    %v1318 = vpop.f32.mrb[0].mxu0
    %v1319 = vpop.f32.mrb[0].mxu0
    %v1320 = vadd.f32 0.0, %v1319
    %v1321 = vpop.f32.mrb[0].mxu0
    %1322 = vmatprep.mubr.bf16.mxu0 %v799
    %1323 = vmatmul.mubr.bf16.gmra.mrb[0].mxu0 %v798
    %v1324 = vpop.f32.mrb[0].mxu0
    %v1325 = vadd.f32 0.0, %v1324
    %v1326 = vpop.f32.mrb[0].mxu0
    %v1327 = vpop.f32.mrb[0].mxu0
    %v1328 = vadd.f32 0.0, %v1327
    %v1329 = vpop.f32.mrb[0].mxu0
    %1330 = vmatprep.mubr.bf16.mxu0 %v803
    %1331 = vmatmul.mubr.bf16.gmra.mrb[0].mxu0 %v802
    %v1332 = vpop.f32.mrb[0].mxu0
    %v1333 = vadd.f32 0.0, %v1332
    %v1334 = vpop.f32.mrb[0].mxu0
    %v1335 = vpop.f32.mrb[0].mxu0
    %v1336 = vadd.f32 0.0, %v1335
    %v1337 = vpop.f32.mrb[0].mxu0
    %1338 = vmatprep.mubr.bf16.mxu0 %v807
    %1339 = vmatmul.mubr.bf16.gmra.mrb[0].mxu0 %v806
    %v1340 = vpop.f32.mrb[0].mxu0
    %v1341 = vadd.f32 0.0, %v1340
    %v1342 = vpop.f32.mrb[0].mxu0
    %v1343 = vpop.f32.mrb[0].mxu0
    %v1344 = vadd.f32 0.0, %v1343
    %v1345 = vpop.f32.mrb[0].mxu0
    %1346 = vmatprep.mubr.bf16.mxu0 %v811
    %1347 = vmatmul.mubr.bf16.gmra.mrb[0].mxu0 %v810
    %v1348 = vpop.f32.mrb[0].mxu0
    %v1349 = vadd.f32 0.0, %v1348
    %v1350 = vpop.f32.mrb[0].mxu0
    %v1351 = vpop.f32.mrb[0].mxu0
    %v1352 = vadd.f32 0.0, %v1351
    %v1353 = vpop.f32.mrb[0].mxu0
    %1354 = vmatprep.mubr.bf16.mxu0 %v815
    %1355 = vmatmul.mubr.bf16.gmra.mrb[0].mxu0 %v814
    %v1356 = vpop.f32.mrb[0].mxu0
    %v1357 = vadd.f32 0.0, %v1356
    %v1358 = vpop.f32.mrb[0].mxu0
    %v1359 = vpop.f32.mrb[0].mxu0
    %v1360 = vadd.f32 0.0, %v1359
    %v1361 = vpop.f32.mrb[0].mxu0
    %1362 = vmatprep.mubr.bf16.mxu0 %v819
    %1363 = vmatmul.mubr.bf16.gmra.mrb[0].mxu0 %v818
    %v1364 = vpop.f32.mrb[0].mxu0
    %v1365 = vadd.f32 0.0, %v1364
    %v1366 = vpop.f32.mrb[0].mxu0
    %v1367 = vpop.f32.mrb[0].mxu0
    %v1368 = vadd.f32 0.0, %v1367
    %v1369 = vpop.f32.mrb[0].mxu0
    %1370 = vmatprep.mubr.bf16.mxu0 %v823
    %1371 = vmatmul.mubr.bf16.gmra.mrb[0].mxu0 %v822
    %v1372 = vpop.f32.mrb[0].mxu0
    %v1373 = vadd.f32 0.0, %v1372
    %v1374 = vpop.f32.mrb[0].mxu0
    %v1375 = vpop.f32.mrb[0].mxu0
    %v1376 = vadd.f32 0.0, %v1375
    %v1377 = vpop.f32.mrb[0].mxu0
    %1378 = vmatprep.mubr.bf16.mxu0 %v827
    %1379 = vmatmul.mubr.bf16.gmra.mrb[0].mxu0 %v826
    %v1380 = vpop.f32.mrb[0].mxu0
    %v1381 = vadd.f32 0.0, %v1380
    %v1382 = vpop.f32.mrb[0].mxu0
    %v1383 = vpop.f32.mrb[0].mxu0
    %v1384 = vadd.f32 0.0, %v1383
    %v1385 = vpop.f32.mrb[0].mxu0
    %1386 = vmatprep.mubr.bf16.mxu0 %v831
    %1387 = vmatmul.mubr.bf16.gmra.mrb[0].mxu0 %v830
    %v1388 = vpop.f32.mrb[0].mxu0
    %v1389 = vadd.f32 0.0, %v1388
    %v1390 = vpop.f32.mrb[0].mxu0
    %v1391 = vpop.f32.mrb[0].mxu0
    %v1392 = vadd.f32 0.0, %v1391
    %v1393 = vpop.f32.mrb[0].mxu0
    %1394 = vmatprep.mubr.bf16.mxu0 %v835
    %1395 = vmatmul.mubr.bf16.gmra.mrb[0].mxu0 %v834
    %v1396 = vpop.f32.mrb[0].mxu0
    %v1397 = vadd.f32 0.0, %v1396
    %v1398 = vpop.f32.mrb[0].mxu0
    %v1399 = vpop.f32.mrb[0].mxu0
    %v1400 = vadd.f32 0.0, %v1399
    %v1401 = vpop.f32.mrb[0].mxu0
    %1402 = vmatprep.mubr.bf16.mxu0 %v839
    %1403 = vmatmul.mubr.bf16.gmra.mrb[0].mxu0 %v838
    %v1404 = vpop.f32.mrb[0].mxu0
    %v1405 = vadd.f32 0.0, %v1404
    %v1406 = vpop.f32.mrb[0].mxu0
    %v1407 = vpop.f32.mrb[0].mxu0
    %v1408 = vadd.f32 0.0, %v1407
    %v1409 = vpop.f32.mrb[0].mxu0
    %1410 = vmatprep.mubr.bf16.mxu0 %v843
    %1411 = vmatmul.mubr.bf16.gmra.mrb[0].mxu0 %v842
    %v1412 = vpop.f32.mrb[0].mxu0
    %v1413 = vadd.f32 0.0, %v1412
    %v1414 = vpop.f32.mrb[0].mxu0
    %v1415 = vpop.f32.mrb[0].mxu0
    %v1416 = vadd.f32 0.0, %v1415
    %v1417 = vpop.f32.mrb[0].mxu0
    %1418 = vmatprep.mubr.bf16.mxu0 %v847
    %1419 = vmatmul.mubr.bf16.gmra.mrb[0].mxu0 %v846
    %v1420 = vpop.f32.mrb[0].mxu0
    %v1421 = vadd.f32 0.0, %v1420
    %v1422 = vpop.f32.mrb[0].mxu0
    %v1423 = vpop.f32.mrb[0].mxu0
    %v1424 = vadd.f32 0.0, %v1423
    %v1425 = vpop.f32.mrb[0].mxu0
    %1426 = vmatprep.mubr.bf16.mxu0 %v851
    %1427 = vmatmul.mubr.bf16.gmra.mrb[0].mxu0 %v850
    %v1428 = vpop.f32.mrb[0].mxu0
    %v1429 = vadd.f32 0.0, %v1428
    %v1430 = vpop.f32.mrb[0].mxu0
    %v1431 = vpop.f32.mrb[0].mxu0
    %v1432 = vadd.f32 0.0, %v1431
    %v1433 = vpop.f32.mrb[0].mxu0
    %1434 = vmatprep.mubr.bf16.mxu0 %v855
    %1435 = vmatmul.mubr.bf16.gmra.mrb[0].mxu0 %v854
    %v1436 = vpop.f32.mrb[0].mxu0
    %v1437 = vadd.f32 0.0, %v1436
    %v1438 = vpop.f32.mrb[0].mxu0
    %v1439 = vpop.f32.mrb[0].mxu0
    %v1440 = vadd.f32 0.0, %v1439
    %v1441 = vpop.f32.mrb[0].mxu0
    %1442 = vmatprep.mubr.bf16.mxu0 %v859
    %1443 = vmatmul.mubr.bf16.gmra.mrb[0].mxu0 %v858
    %v1444 = vpop.f32.mrb[0].mxu0
    %v1445 = vadd.f32 0.0, %v1444
    %v1446 = vpop.f32.mrb[0].mxu0
    %v1447 = vpop.f32.mrb[0].mxu0
    %v1448 = vadd.f32 0.0, %v1447
    %v1449 = vpop.f32.mrb[0].mxu0
    %1450 = vmatprep.mubr.bf16.mxu0 %v863
    %1451 = vmatmul.mubr.bf16.gmra.mrb[0].mxu0 %v862
    %v1452 = vpop.f32.mrb[0].mxu0
    %v1453 = vadd.f32 0.0, %v1452
    %v1454 = vpop.f32.mrb[0].mxu0
    %v1455 = vpop.f32.mrb[0].mxu0
    %v1456 = vadd.f32 0.0, %v1455
    %v1457 = vpop.f32.mrb[0].mxu0
    %1458 = vmatprep.mubr.bf16.mxu0 %v867
    %1459 = vmatmul.mubr.bf16.gmra.mrb[0].mxu0 %v866
    %v1460 = vpop.f32.mrb[0].mxu0
    %v1461 = vadd.f32 0.0, %v1460
    %v1462 = vpop.f32.mrb[0].mxu0
    %v1463 = vpop.f32.mrb[0].mxu0
    %v1464 = vadd.f32 0.0, %v1463
    %v1465 = vpop.f32.mrb[0].mxu0
    %1466 = vmatprep.mubr.bf16.mxu0 %v871
    %1467 = vmatmul.mubr.bf16.gmra.mrb[0].mxu0 %v870
    %v1468 = vpop.f32.mrb[0].mxu0
    %v1469 = vadd.f32 0.0, %v1468
    %v1470 = vpop.f32.mrb[0].mxu0
    %v1471 = vpop.f32.mrb[0].mxu0
    %v1472 = vadd.f32 0.0, %v1471
    %v1473 = vpop.f32.mrb[0].mxu0
    %1474 = vmatprep.mubr.bf16.mxu0 %v875
    %1475 = vmatmul.mubr.bf16.gmra.mrb[0].mxu0 %v874
    %v1476 = vpop.f32.mrb[0].mxu0
    %v1477 = vadd.f32 0.0, %v1476
    %v1478 = vpop.f32.mrb[0].mxu0
    %v1479 = vpop.f32.mrb[0].mxu0
    %v1480 = vadd.f32 0.0, %v1479
    %v1481 = vpop.f32.mrb[0].mxu0
    %1482 = vmatprep.mubr.bf16.mxu0 %v879
    %1483 = vmatmul.mubr.bf16.gmra.mrb[0].mxu0 %v878
    %v1484 = vpop.f32.mrb[0].mxu0
    %v1485 = vadd.f32 0.0, %v1484
    %v1486 = vpop.f32.mrb[0].mxu0
    %v1487 = vpop.f32.mrb[0].mxu0
    %v1488 = vadd.f32 0.0, %v1487
    %v1489 = vpop.f32.mrb[0].mxu0
    %1490 = vdwg.mxu0
    %1491 = vmatprep.subr.bf16.mxu0 0
    %1492 = vmatpush1.bf16.msra.mxu0 %v1154
    %1493 = vmatprep.subr.bf16.mxu0 0
    %1494 = vmatpush1.bf16.msra.mxu0 %v1155
    %1495 = vmatprep.subr.bf16.mxu0 0
    %1496 = vmatpush1.bf16.msra.mxu0 %v1156
    %1497 = vmatprep.subr.bf16.mxu0 0
    %1498 = vmatpush1.bf16.msra.mxu0 %v1157
    %1499 = vmatprep.subr.bf16.mxu0 0
    %1500 = vmatpush1.bf16.msra.mxu0 %v1158
    %1501 = vmatprep.subr.bf16.mxu0 0
    %1502 = vmatpush1.bf16.msra.mxu0 %v1159
    %1503 = vmatprep.subr.bf16.mxu0 0
    %1504 = vmatpush1.bf16.msra.mxu0 %v1160
    %1505 = vmatprep.subr.bf16.mxu0 0
    %1506 = vmatpush1.bf16.msra.mxu0 %v1161
    %1507 = vmatprep.subr.bf16.mxu0 0
    %1508 = vmatpush1.bf16.msra.mxu0 %v1162
    %1509 = vmatprep.subr.bf16.mxu0 0
    %1510 = vmatpush1.bf16.msra.mxu0 %v1163
    %1511 = vmatprep.subr.bf16.mxu0 0
    %1512 = vmatpush1.bf16.msra.mxu0 %v1164
    %1513 = vmatprep.subr.bf16.mxu0 0
    %1514 = vmatpush1.bf16.msra.mxu0 %v1165
    %1515 = vmatprep.subr.bf16.mxu0 0
    %1516 = vmatpush1.bf16.msra.mxu0 %v1166
    %1517 = vmatprep.subr.bf16.mxu0 0
    %1518 = vmatpush1.bf16.msra.mxu0 %v1167
    %1519 = vmatprep.subr.bf16.mxu0 0
    %1520 = vmatpush1.bf16.msra.mxu0 %v1168
    %1521 = vmatprep.subr.bf16.mxu0 0
    %1522 = vmatpush1.bf16.msra.mxu0 %v1169
    %1523 = vmatprep.mubr.bf16.mxu0 %v757
    %1524 = vmatmul.mubr.bf16.gmra.mrb[0].mxu0 %v756
    %v1525 = vpop.f32.mrb[0].mxu0
    %v1526 = vadd.f32 %v1237, %v1525
    %v1527 = vpop.f32.mrb[0].mxu0
    %v1528 = vpop.f32.mrb[0].mxu0
    %v1529 = vadd.f32 %v1240, %v1528
    %v1530 = vpop.f32.mrb[0].mxu0
    %1531 = vmatprep.mubr.bf16.mxu0 %v761
    %1532 = vmatmul.mubr.bf16.gmra.mrb[0].mxu0 %v760
    %v1533 = vpop.f32.mrb[0].mxu0
    %v1534 = vadd.f32 %v1245, %v1533
    %v1535 = vpop.f32.mrb[0].mxu0
    %v1536 = vpop.f32.mrb[0].mxu0
    %v1537 = vadd.f32 %v1248, %v1536
    %v1538 = vpop.f32.mrb[0].mxu0
    %1539 = vmatprep.mubr.bf16.mxu0 %v765
    %1540 = vmatmul.mubr.bf16.gmra.mrb[0].mxu0 %v764
    %v1541 = vpop.f32.mrb[0].mxu0
    %v1542 = vadd.f32 %v1253, %v1541
    %v1543 = vpop.f32.mrb[0].mxu0
    %v1544 = vpop.f32.mrb[0].mxu0
    %v1545 = vadd.f32 %v1256, %v1544
    %v1546 = vpop.f32.mrb[0].mxu0
    %1547 = vmatprep.mubr.bf16.mxu0 %v769
    %1548 = vmatmul.mubr.bf16.gmra.mrb[0].mxu0 %v768
    %v1549 = vpop.f32.mrb[0].mxu0
    %v1550 = vadd.f32 %v1261, %v1549
    %v1551 = vpop.f32.mrb[0].mxu0
    %v1552 = vpop.f32.mrb[0].mxu0
    %v1553 = vadd.f32 %v1264, %v1552
    %v1554 = vpop.f32.mrb[0].mxu0
    %1555 = vmatprep.mubr.bf16.mxu0 %v773
    %1556 = vmatmul.mubr.bf16.gmra.mrb[0].mxu0 %v772
    %v1557 = vpop.f32.mrb[0].mxu0
    %v1558 = vadd.f32 %v1269, %v1557
    %v1559 = vpop.f32.mrb[0].mxu0
    %v1560 = vpop.f32.mrb[0].mxu0
    %v1561 = vadd.f32 %v1272, %v1560
    %v1562 = vpop.f32.mrb[0].mxu0
    %1563 = vmatprep.mubr.bf16.mxu0 %v777
    %1564 = vmatmul.mubr.bf16.gmra.mrb[0].mxu0 %v776
    %v1565 = vpop.f32.mrb[0].mxu0
    %v1566 = vadd.f32 %v1277, %v1565
    %v1567 = vpop.f32.mrb[0].mxu0
    %v1568 = vpop.f32.mrb[0].mxu0
    %v1569 = vadd.f32 %v1280, %v1568
    %v1570 = vpop.f32.mrb[0].mxu0
    %1571 = vmatprep.mubr.bf16.mxu0 %v781
    %1572 = vmatmul.mubr.bf16.gmra.mrb[0].mxu0 %v780
    %v1573 = vpop.f32.mrb[0].mxu0
    %v1574 = vadd.f32 %v1285, %v1573
    %v1575 = vpop.f32.mrb[0].mxu0
    %v1576 = vpop.f32.mrb[0].mxu0
    %v1577 = vadd.f32 %v1288, %v1576
    %v1578 = vpop.f32.mrb[0].mxu0
    %1579 = vmatprep.mubr.bf16.mxu0 %v785
    %1580 = vmatmul.mubr.bf16.gmra.mrb[0].mxu0 %v784
    %v1581 = vpop.f32.mrb[0].mxu0
    %v1582 = vadd.f32 %v1293, %v1581
    %v1583 = vpop.f32.mrb[0].mxu0
    %v1584 = vpop.f32.mrb[0].mxu0
    %v1585 = vadd.f32 %v1296, %v1584
    %v1586 = vpop.f32.mrb[0].mxu0
    %1587 = vmatprep.mubr.bf16.mxu0 %v789
    %1588 = vmatmul.mubr.bf16.gmra.mrb[0].mxu0 %v788
    %v1589 = vpop.f32.mrb[0].mxu0
    %v1590 = vadd.f32 %v1301, %v1589
    %v1591 = vpop.f32.mrb[0].mxu0
    %v1592 = vpop.f32.mrb[0].mxu0
    %v1593 = vadd.f32 %v1304, %v1592
    %v1594 = vpop.f32.mrb[0].mxu0
    %1595 = vmatprep.mubr.bf16.mxu0 %v793
    %1596 = vmatmul.mubr.bf16.gmra.mrb[0].mxu0 %v792
    %v1597 = vpop.f32.mrb[0].mxu0
    %v1598 = vadd.f32 %v1309, %v1597
    %v1599 = vpop.f32.mrb[0].mxu0
    %v1600 = vpop.f32.mrb[0].mxu0
    %v1601 = vadd.f32 %v1312, %v1600
    %v1602 = vpop.f32.mrb[0].mxu0
    %1603 = vmatprep.mubr.bf16.mxu0 %v797
    %1604 = vmatmul.mubr.bf16.gmra.mrb[0].mxu0 %v796
    %v1605 = vpop.f32.mrb[0].mxu0
    %v1606 = vadd.f32 %v1317, %v1605
    %v1607 = vpop.f32.mrb[0].mxu0
    %v1608 = vpop.f32.mrb[0].mxu0
    %v1609 = vadd.f32 %v1320, %v1608
    %v1610 = vpop.f32.mrb[0].mxu0
    %1611 = vmatprep.mubr.bf16.mxu0 %v801
    %1612 = vmatmul.mubr.bf16.gmra.mrb[0].mxu0 %v800
    %v1613 = vpop.f32.mrb[0].mxu0
    %v1614 = vadd.f32 %v1325, %v1613
    %v1615 = vpop.f32.mrb[0].mxu0
    %v1616 = vpop.f32.mrb[0].mxu0
    %v1617 = vadd.f32 %v1328, %v1616
    %v1618 = vpop.f32.mrb[0].mxu0
    %1619 = vmatprep.mubr.bf16.mxu0 %v805
    %1620 = vmatmul.mubr.bf16.gmra.mrb[0].mxu0 %v804
    %v1621 = vpop.f32.mrb[0].mxu0
    %v1622 = vadd.f32 %v1333, %v1621
    %v1623 = vpop.f32.mrb[0].mxu0
    %v1624 = vpop.f32.mrb[0].mxu0
    %v1625 = vadd.f32 %v1336, %v1624
    %v1626 = vpop.f32.mrb[0].mxu0
    %1627 = vmatprep.mubr.bf16.mxu0 %v809
    %1628 = vmatmul.mubr.bf16.gmra.mrb[0].mxu0 %v808
    %v1629 = vpop.f32.mrb[0].mxu0
    %v1630 = vadd.f32 %v1341, %v1629
    %v1631 = vpop.f32.mrb[0].mxu0
    %v1632 = vpop.f32.mrb[0].mxu0
    %v1633 = vadd.f32 %v1344, %v1632
    %v1634 = vpop.f32.mrb[0].mxu0
    %1635 = vmatprep.mubr.bf16.mxu0 %v813
    %1636 = vmatmul.mubr.bf16.gmra.mrb[0].mxu0 %v812
    %v1637 = vpop.f32.mrb[0].mxu0
    %v1638 = vadd.f32 %v1349, %v1637
    %v1639 = vpop.f32.mrb[0].mxu0
    %v1640 = vpop.f32.mrb[0].mxu0
    %v1641 = vadd.f32 %v1352, %v1640
    %v1642 = vpop.f32.mrb[0].mxu0
    %1643 = vmatprep.mubr.bf16.mxu0 %v817
    %1644 = vmatmul.mubr.bf16.gmra.mrb[0].mxu0 %v816
    %v1645 = vpop.f32.mrb[0].mxu0
    %v1646 = vadd.f32 %v1357, %v1645
    %v1647 = vpop.f32.mrb[0].mxu0
    %v1648 = vpop.f32.mrb[0].mxu0
    %v1649 = vadd.f32 %v1360, %v1648
    %v1650 = vpop.f32.mrb[0].mxu0
    %1651 = vmatprep.mubr.bf16.mxu0 %v821
    %1652 = vmatmul.mubr.bf16.gmra.mrb[0].mxu0 %v820
    %v1653 = vpop.f32.mrb[0].mxu0
    %v1654 = vadd.f32 %v1365, %v1653
    %v1655 = vpop.f32.mrb[0].mxu0
    %v1656 = vpop.f32.mrb[0].mxu0
    %v1657 = vadd.f32 %v1368, %v1656
    %v1658 = vpop.f32.mrb[0].mxu0
    %1659 = vmatprep.mubr.bf16.mxu0 %v825
    %1660 = vmatmul.mubr.bf16.gmra.mrb[0].mxu0 %v824
    %v1661 = vpop.f32.mrb[0].mxu0
    %v1662 = vadd.f32 %v1373, %v1661
    %v1663 = vpop.f32.mrb[0].mxu0
    %v1664 = vpop.f32.mrb[0].mxu0
    %v1665 = vadd.f32 %v1376, %v1664
    %v1666 = vpop.f32.mrb[0].mxu0
    %1667 = vmatprep.mubr.bf16.mxu0 %v829
    %1668 = vmatmul.mubr.bf16.gmra.mrb[0].mxu0 %v828
    %v1669 = vpop.f32.mrb[0].mxu0
    %v1670 = vadd.f32 %v1381, %v1669
    %v1671 = vpop.f32.mrb[0].mxu0
    %v1672 = vpop.f32.mrb[0].mxu0
    %v1673 = vadd.f32 %v1384, %v1672
    %v1674 = vpop.f32.mrb[0].mxu0
    %1675 = vmatprep.mubr.bf16.mxu0 %v833
    %1676 = vmatmul.mubr.bf16.gmra.mrb[0].mxu0 %v832
    %v1677 = vpop.f32.mrb[0].mxu0
    %v1678 = vadd.f32 %v1389, %v1677
    %v1679 = vpop.f32.mrb[0].mxu0
    %v1680 = vpop.f32.mrb[0].mxu0
    %v1681 = vadd.f32 %v1392, %v1680
    %v1682 = vpop.f32.mrb[0].mxu0
    %1683 = vmatprep.mubr.bf16.mxu0 %v837
    %1684 = vmatmul.mubr.bf16.gmra.mrb[0].mxu0 %v836
    %v1685 = vpop.f32.mrb[0].mxu0
    %v1686 = vadd.f32 %v1397, %v1685
    %v1687 = vpop.f32.mrb[0].mxu0
    %v1688 = vpop.f32.mrb[0].mxu0
    %v1689 = vadd.f32 %v1400, %v1688
    %v1690 = vpop.f32.mrb[0].mxu0
    %1691 = vmatprep.mubr.bf16.mxu0 %v841
    %1692 = vmatmul.mubr.bf16.gmra.mrb[0].mxu0 %v840
    %v1693 = vpop.f32.mrb[0].mxu0
    %v1694 = vadd.f32 %v1405, %v1693
    %v1695 = vpop.f32.mrb[0].mxu0
    %v1696 = vpop.f32.mrb[0].mxu0
    %v1697 = vadd.f32 %v1408, %v1696
    %v1698 = vpop.f32.mrb[0].mxu0
    %1699 = vmatprep.mubr.bf16.mxu0 %v845
    %1700 = vmatmul.mubr.bf16.gmra.mrb[0].mxu0 %v844
    %v1701 = vpop.f32.mrb[0].mxu0
    %v1702 = vadd.f32 %v1413, %v1701
    %v1703 = vpop.f32.mrb[0].mxu0
    %v1704 = vpop.f32.mrb[0].mxu0
    %v1705 = vadd.f32 %v1416, %v1704
    %v1706 = vpop.f32.mrb[0].mxu0
    %1707 = vmatprep.mubr.bf16.mxu0 %v849
    %1708 = vmatmul.mubr.bf16.gmra.mrb[0].mxu0 %v848
    %v1709 = vpop.f32.mrb[0].mxu0
    %v1710 = vadd.f32 %v1421, %v1709
    %v1711 = vpop.f32.mrb[0].mxu0
    %v1712 = vpop.f32.mrb[0].mxu0
    %v1713 = vadd.f32 %v1424, %v1712
    %v1714 = vpop.f32.mrb[0].mxu0
    %1715 = vmatprep.mubr.bf16.mxu0 %v853
    %1716 = vmatmul.mubr.bf16.gmra.mrb[0].mxu0 %v852
    %v1717 = vpop.f32.mrb[0].mxu0
    %v1718 = vadd.f32 %v1429, %v1717
    %v1719 = vpop.f32.mrb[0].mxu0
    %v1720 = vpop.f32.mrb[0].mxu0
    %v1721 = vadd.f32 %v1432, %v1720
    %v1722 = vpop.f32.mrb[0].mxu0
    %1723 = vmatprep.mubr.bf16.mxu0 %v857
    %1724 = vmatmul.mubr.bf16.gmra.mrb[0].mxu0 %v856
    %v1725 = vpop.f32.mrb[0].mxu0
    %v1726 = vadd.f32 %v1437, %v1725
    %v1727 = vpop.f32.mrb[0].mxu0
    %v1728 = vpop.f32.mrb[0].mxu0
    %v1729 = vadd.f32 %v1440, %v1728
    %v1730 = vpop.f32.mrb[0].mxu0
    %1731 = vmatprep.mubr.bf16.mxu0 %v861
    %1732 = vmatmul.mubr.bf16.gmra.mrb[0].mxu0 %v860
    %v1733 = vpop.f32.mrb[0].mxu0
    %v1734 = vadd.f32 %v1445, %v1733
    %v1735 = vpop.f32.mrb[0].mxu0
    %v1736 = vpop.f32.mrb[0].mxu0
    %v1737 = vadd.f32 %v1448, %v1736
    %v1738 = vpop.f32.mrb[0].mxu0
    %1739 = vmatprep.mubr.bf16.mxu0 %v865
    %1740 = vmatmul.mubr.bf16.gmra.mrb[0].mxu0 %v864
    %v1741 = vpop.f32.mrb[0].mxu0
    %v1742 = vadd.f32 %v1453, %v1741
    %v1743 = vpop.f32.mrb[0].mxu0
    %v1744 = vpop.f32.mrb[0].mxu0
    %v1745 = vadd.f32 %v1456, %v1744
    %v1746 = vpop.f32.mrb[0].mxu0
    %1747 = vmatprep.mubr.bf16.mxu0 %v869
    %1748 = vmatmul.mubr.bf16.gmra.mrb[0].mxu0 %v868
    %v1749 = vpop.f32.mrb[0].mxu0
    %v1750 = vadd.f32 %v1461, %v1749
    %v1751 = vpop.f32.mrb[0].mxu0
    %v1752 = vpop.f32.mrb[0].mxu0
    %v1753 = vadd.f32 %v1464, %v1752
    %v1754 = vpop.f32.mrb[0].mxu0
    %1755 = vmatprep.mubr.bf16.mxu0 %v873
    %1756 = vmatmul.mubr.bf16.gmra.mrb[0].mxu0 %v872
    %v1757 = vpop.f32.mrb[0].mxu0
    %v1758 = vadd.f32 %v1469, %v1757
    %v1759 = vpop.f32.mrb[0].mxu0
    %v1760 = vpop.f32.mrb[0].mxu0
    %v1761 = vadd.f32 %v1472, %v1760
    %v1762 = vpop.f32.mrb[0].mxu0
    %1763 = vmatprep.mubr.bf16.mxu0 %v877
    %1764 = vmatmul.mubr.bf16.gmra.mrb[0].mxu0 %v876
    %v1765 = vpop.f32.mrb[0].mxu0
    %v1766 = vadd.f32 %v1477, %v1765
    %v1767 = vpop.f32.mrb[0].mxu0
    %v1768 = vpop.f32.mrb[0].mxu0
    %v1769 = vadd.f32 %v1480, %v1768
    %v1770 = vpop.f32.mrb[0].mxu0
    %1771 = vmatprep.mubr.bf16.mxu0 %v881
    %1772 = vmatmul.mubr.bf16.gmra.mrb[0].mxu0 %v880
    %v1773 = vpop.f32.mrb[0].mxu0
    %v1774 = vadd.f32 %v1485, %v1773
    %v1775 = vpop.f32.mrb[0].mxu0
    %v1776 = vpop.f32.mrb[0].mxu0
    %v1777 = vadd.f32 %v1488, %v1776
    %v1778 = vpop.f32.mrb[0].mxu0
    %1779 = vdwg.mxu0
    %v1780 = vadd.f32 %v178, %v1526
    %v1781 = vadd.f32 %v179, %v1529
    %v1782 = vadd.f32 %v180, %v1534
    %v1783 = vadd.f32 %v181, %v1537
    %v1784 = vadd.f32 %v182, %v1542
    %v1785 = vadd.f32 %v183, %v1545
    %v1786 = vadd.f32 %v184, %v1550
    %v1787 = vadd.f32 %v185, %v1553
    %v1788 = vadd.f32 %v186, %v1558
    %v1789 = vadd.f32 %v187, %v1561
    %v1790 = vadd.f32 %v188, %v1566
    %v1791 = vadd.f32 %v189, %v1569
    %v1792 = vadd.f32 %v190, %v1574
    %v1793 = vadd.f32 %v191, %v1577
    %v1794 = vadd.f32 %v192, %v1582
    %v1795 = vadd.f32 %v193, %v1585
    %v1796 = vadd.f32 %v194, %v1590
    %v1797 = vadd.f32 %v195, %v1593
    %v1798 = vadd.f32 %v196, %v1598
    %v1799 = vadd.f32 %v197, %v1601
    %v1800 = vadd.f32 %v198, %v1606
    %v1801 = vadd.f32 %v199, %v1609
    %v1802 = vadd.f32 %v200, %v1614
    %v1803 = vadd.f32 %v201, %v1617
    %v1804 = vadd.f32 %v202, %v1622
    %v1805 = vadd.f32 %v203, %v1625
    %v1806 = vadd.f32 %v204, %v1630
    %v1807 = vadd.f32 %v205, %v1633
    %v1808 = vadd.f32 %v206, %v1638
    %v1809 = vadd.f32 %v207, %v1641
    %v1810 = vadd.f32 %v208, %v1646
    %v1811 = vadd.f32 %v209, %v1649
    %v1812 = vadd.f32 %v210, %v1654
    %v1813 = vadd.f32 %v211, %v1657
    %v1814 = vadd.f32 %v212, %v1662
    %v1815 = vadd.f32 %v213, %v1665
    %v1816 = vadd.f32 %v214, %v1670
    %v1817 = vadd.f32 %v215, %v1673
    %v1818 = vadd.f32 %v216, %v1678
    %v1819 = vadd.f32 %v217, %v1681
    %v1820 = vadd.f32 %v218, %v1686
    %v1821 = vadd.f32 %v219, %v1689
    %v1822 = vadd.f32 %v220, %v1694
    %v1823 = vadd.f32 %v221, %v1697
    %v1824 = vadd.f32 %v222, %v1702
    %v1825 = vadd.f32 %v223, %v1705
    %v1826 = vadd.f32 %v224, %v1710
    %v1827 = vadd.f32 %v225, %v1713
    %v1828 = vadd.f32 %v226, %v1718
    %v1829 = vadd.f32 %v227, %v1721
    %v1830 = vadd.f32 %v228, %v1726
    %v1831 = vadd.f32 %v229, %v1729
    %v1832 = vadd.f32 %v230, %v1734
    %v1833 = vadd.f32 %v231, %v1737
    %v1834 = vadd.f32 %v232, %v1742
    %v1835 = vadd.f32 %v233, %v1745
    %v1836 = vadd.f32 %v234, %v1750
    %v1837 = vadd.f32 %v235, %v1753
    %v1838 = vadd.f32 %v236, %v1758
    %v1839 = vadd.f32 %v237, %v1761
    %v1840 = vadd.f32 %v238, %v1766
    %v1841 = vadd.f32 %v239, %v1769
    %v1842 = vadd.f32 %v240, %v1774
    %v1843 = vadd.f32 %v241, %v1777
    %1844 = vst [vmem:[#allocation7] sm:$0xff] %v1780
    %1845 = vst [vmem:[#allocation7 + $0x8] sm:$0xff] %v1781
    %1846 = vst [vmem:[#allocation7 + $0x10] sm:$0xff] %v1782
    %1847 = vst [vmem:[#allocation7 + $0x18] sm:$0xff] %v1783
    %1848 = vst [vmem:[#allocation7 + $0x20] sm:$0xff] %v1784
    %1849 = vst [vmem:[#allocation7 + $0x28] sm:$0xff] %v1785
    %1850 = vst [vmem:[#allocation7 + $0x30] sm:$0xff] %v1786
    %1851 = vst [vmem:[#allocation7 + $0x38] sm:$0xff] %v1787
    %1852 = vst [vmem:[#allocation7 + $0x40] sm:$0xff] %v1788
    %1853 = vst [vmem:[#allocation7 + $0x48] sm:$0xff] %v1789
    %1854 = vst [vmem:[#allocation7 + $0x50] sm:$0xff] %v1790
    %1855 = vst [vmem:[#allocation7 + $0x58] sm:$0xff] %v1791
    %1856 = vst [vmem:[#allocation7 + $0x60] sm:$0xff] %v1792
    %1857 = vst [vmem:[#allocation7 + $0x68] sm:$0xff] %v1793
    %1858 = vst [vmem:[#allocation7 + $0x70] sm:$0xff] %v1794
    %1859 = vst [vmem:[#allocation7 + $0x78] sm:$0xff] %v1795
    %1860 = vst [vmem:[#allocation7 + $0x80] sm:$0xff] %v1796
    %1861 = vst [vmem:[#allocation7 + $0x88] sm:$0xff] %v1797
    %1862 = vst [vmem:[#allocation7 + $0x90] sm:$0xff] %v1798
    %1863 = vst [vmem:[#allocation7 + $0x98] sm:$0xff] %v1799
    %1864 = vst [vmem:[#allocation7 + $0xa0] sm:$0xff] %v1800
    %1865 = vst [vmem:[#allocation7 + $0xa8] sm:$0xff] %v1801
    %1866 = vst [vmem:[#allocation7 + $0xb0] sm:$0xff] %v1802
    %1867 = vst [vmem:[#allocation7 + $0xb8] sm:$0xff] %v1803
    %1868 = vst [vmem:[#allocation7 + $0xc0] sm:$0xff] %v1804
    %1869 = vst [vmem:[#allocation7 + $0xc8] sm:$0xff] %v1805
    %1870 = vst [vmem:[#allocation7 + $0xd0] sm:$0xff] %v1806
    %1871 = vst [vmem:[#allocation7 + $0xd8] sm:$0xff] %v1807
    %1872 = vst [vmem:[#allocation7 + $0xe0] sm:$0xff] %v1808
    %1873 = vst [vmem:[#allocation7 + $0xe8] sm:$0xff] %v1809
    %1874 = vst [vmem:[#allocation7 + $0xf0] sm:$0xff] %v1810
    %1875 = vst [vmem:[#allocation7 + $0xf8] sm:$0xff] %v1811
    %1876 = vst [vmem:[#allocation7 + $0x100] sm:$0xff] %v1812
    %1877 = vst [vmem:[#allocation7 + $0x108] sm:$0xff] %v1813
    %1878 = vst [vmem:[#allocation7 + $0x110] sm:$0xff] %v1814
    %1879 = vst [vmem:[#allocation7 + $0x118] sm:$0xff] %v1815
    %1880 = vst [vmem:[#allocation7 + $0x120] sm:$0xff] %v1816
    %1881 = vst [vmem:[#allocation7 + $0x128] sm:$0xff] %v1817
    %1882 = vst [vmem:[#allocation7 + $0x130] sm:$0xff] %v1818
    %1883 = vst [vmem:[#allocation7 + $0x138] sm:$0xff] %v1819
    %1884 = vst [vmem:[#allocation7 + $0x140] sm:$0xff] %v1820
    %1885 = vst [vmem:[#allocation7 + $0x148] sm:$0xff] %v1821
    %1886 = vst [vmem:[#allocation7 + $0x150] sm:$0xff] %v1822
    %1887 = vst [vmem:[#allocation7 + $0x158] sm:$0xff] %v1823
    %1888 = vst [vmem:[#allocation7 + $0x160] sm:$0xff] %v1824
    %1889 = vst [vmem:[#allocation7 + $0x168] sm:$0xff] %v1825
    %1890 = vst [vmem:[#allocation7 + $0x170] sm:$0xff] %v1826
    %1891 = vst [vmem:[#allocation7 + $0x178] sm:$0xff] %v1827
    %1892 = vst [vmem:[#allocation7 + $0x180] sm:$0xff] %v1828
    %1893 = vst [vmem:[#allocation7 + $0x188] sm:$0xff] %v1829
    %1894 = vst [vmem:[#allocation7 + $0x190] sm:$0xff] %v1830
    %1895 = vst [vmem:[#allocation7 + $0x198] sm:$0xff] %v1831
    %1896 = vst [vmem:[#allocation7 + $0x1a0] sm:$0xff] %v1832
    %1897 = vst [vmem:[#allocation7 + $0x1a8] sm:$0xff] %v1833
    %1898 = vst [vmem:[#allocation7 + $0x1b0] sm:$0xff] %v1834
    %1899 = vst [vmem:[#allocation7 + $0x1b8] sm:$0xff] %v1835
    %1900 = vst [vmem:[#allocation7 + $0x1c0] sm:$0xff] %v1836
    %1901 = vst [vmem:[#allocation7 + $0x1c8] sm:$0xff] %v1837
    %1902 = vst [vmem:[#allocation7 + $0x1d0] sm:$0xff] %v1838
    %1903 = vst [vmem:[#allocation7 + $0x1d8] sm:$0xff] %v1839
    %1904 = vst [vmem:[#allocation7 + $0x1e0] sm:$0xff] %v1840
    %1905 = vst [vmem:[#allocation7 + $0x1e8] sm:$0xff] %v1841
    %1906 = vst [vmem:[#allocation7 + $0x1f0] sm:$0xff] %v1842
    %1907 = vst [vmem:[#allocation7 + $0x1f8] sm:$0xff] %v1843
    // Predicated region
    $region22: #{tpu_custom_call.1} parent=1 // pred_check
      _
    $region23: #{tpu_custom_call.1} parent=1 // pred_check_branch
      %1909 = sbr.rel (0) target = $region25
    $region24: #{tpu_custom_call.1} parent=1 // pred_region
      %s1911 = ssub.s32 8192, 8192
      %1912 = vsyncadd [#allocation4], %s1911
      %s1913 = sshll.u32 [#allocation7], 4
      %s1914 = int_to_ptr.vmem [resolvable:$true] %s1913
      %1919 = dma.vmem_to_hbm [thread:$0]  %s1914, 8192, %s2, [#allocation4], 128, 128, 8
    $region25: #{tpu_custom_call.1} parent=1 // pred_fallthru
      _
    // Predicated region
    $region26: #{tpu_custom_call.1} parent=1 // pred_check
      _
    $region27: #{tpu_custom_call.1} parent=1 // pred_check_branch
      %1921 = sbr.rel (0) target = $region29
    $region28: #{tpu_custom_call.1} parent=1 // pred_region
      %1922 = dma.done [#allocation4], 8192
    $region29: #{tpu_custom_call.1} parent=1 // pred_fallthru
      _
    %1923 = vsyncpa [#allocation3], 1
    %1924 = vsyncpa [#allocation6], 1
    %1925 = vsyncpa [#allocation4], 1

</llo_original>
